<compile_context>
chip_gen: v7x
topology: tpu7x:2x2x1
jax: 0.10.0
libtpu: 0.0.40
codegen_flags: <defaults>
</compile_context>

<pallas_src>
import functools

import jax
import jax.numpy as jnp
from jax.experimental import pallas as pl
from jax.experimental.pallas import tpu as pltpu


_LN_EPS = 1e-5
_TARGET_TILE_BYTES = 4 * 1024 * 1024      # per-grid-step HBM traffic target (2–8 MiB sweet spot)
_MIN_GRID = 2                             # keep >= 2 grid steps so both v7x TCs get work


def _round_down_to_multiple(x, m):
    return max(m, (x // m) * m)


def _lane_pad(d):
    return ((d + 127) // 128) * 128


def _row_multiple(dtype):
    # sublane packing: 8 rows/vreg for 4-byte, 16 for 2-byte, 32 for 1-byte dtypes
    itemsize = jnp.dtype(dtype).itemsize
    return {4: 8, 2: 16, 1: 32}.get(itemsize, 8)


def _vmem_limits():
    """Generation-aware scoped-VMEM limit + tile budget.
    v5e/v6e (128 MiB physical) -> 64 MiB scoped / 48 MiB tile budget;
    v7x (64 MiB physical)      -> 32 MiB scoped / 24 MiB tile budget (fallback)."""
    phys = None
    try:
        phys = getattr(pltpu.get_tpu_info(), "vmem_capacity_bytes", None)
    except Exception:
        phys = None
    if not phys:
        phys = 64 * 1024 * 1024           # conservative: assume v7x per-TC VMEM
    limit = max(32 * 1024 * 1024, min(phys // 2, 96 * 1024 * 1024))
    return limit, (limit * 3) // 4


def _choose_tile_t(T, d_in, d_out, in_dtype, out_dtype, vmem_budget):
    """Token-tile rows, sized by lane-padded BYTES (not row count).

    Targets ~_TARGET_TILE_BYTES of HBM traffic per grid step, caps the tile at
    cdiv(T, 2) so the 'parallel' axis has work for both v7x TensorCores, and
    shrinks until the double-buffered in/out tiles plus the in-kernel f32
    intermediates fit the scoped-VMEM budget."""
    row_mult = max(_row_multiple(in_dtype), _row_multiple(out_dtype))
    if T <= row_mult:
        return T                           # full-extent block (allowed for any T)
    d_in_p, d_out_p = _lane_pad(d_in), _lane_pad(d_out)
    in_item = jnp.dtype(in_dtype).itemsize
    out_item = jnp.dtype(out_dtype).itemsize
    bytes_per_row_io = d_in_p * in_item + d_out_p * out_item      # HBM traffic / VMEM tiles
    bytes_per_row_f32 = (2 * d_in_p + d_out_p) * 4                # f32 upcasts inside the kernel

    tile = _TARGET_TILE_BYTES // max(1, bytes_per_row_io)
    if T > 2 * row_mult:
        tile = min(tile, pl.cdiv(T, _MIN_GRID))                   # guarantee >= 2 grid steps
    tile = _round_down_to_multiple(min(tile, T), row_mult)
    while tile > row_mult and tile * (2 * bytes_per_row_io + bytes_per_row_f32) > vmem_budget:
        tile = _round_down_to_multiple(tile // 2, row_mult)
    return min(tile, T)


# ------------------- fused PreNorm + Linear (gamma/beta folded) -------------------
def _prenorm_linear_kernel(x_ref, w_ref, bias_ref, o_ref, *, eps):
    # x: (tile_t, Din).  w: (Din, Dout) with gamma pre-folded; bias has beta@W folded.
    x = x_ref[...].astype(jnp.float32)
    mean = jnp.mean(x, axis=-1, keepdims=True)          # lane-axis reduce (XLU)
    centered = x - mean
    var = jnp.mean(centered * centered, axis=-1, keepdims=True)
    inv = jax.lax.rsqrt(var + eps)                      # EUP slot
    y = centered * inv                                  # LN core; stays in VMEM/vregs
    acc = jnp.dot(y.astype(w_ref.dtype), w_ref[...],
                  preferred_element_type=jnp.float32)   # MXU, f32 accumulate
    acc = acc + bias_ref[...].astype(jnp.float32)
    o_ref[...] = acc.astype(o_ref.dtype)


def fold_prenorm_linear_params(gamma, beta, weight, bias=None):
    """One-time parameter setup: fold LayerNorm's affine into the Linear.

    weight is in nn.Linear layout (Dout, Din).  Returns (w_folded (Din, Dout) in the
    weight dtype, b_folded (1, Dout) f32) such that
        LayerNorm(x; gamma, beta) @ weight.T + bias
     == ((x - mean) * rsqrt(var + eps)) @ w_folded + b_folded.
    For Attention, pass the concatenated Wq|Wk|Wv so Dout >= 128 (lane-dense stores)."""
    w_t = jnp.asarray(weight, jnp.float32).T                       # (Din, Dout)
    g = jnp.asarray(gamma, jnp.float32).reshape(-1, 1)
    b = jnp.asarray(beta, jnp.float32).reshape(1, -1)
    w_folded = (g * w_t).astype(weight.dtype)                      # fold done in f32
    b_folded = (b @ w_t).reshape(1, -1)
    if bias is not None:
        b_folded = b_folded + jnp.asarray(bias, jnp.float32).reshape(1, -1)
    return w_folded, b_folded


def prenorm_linear_pallas(x, w_folded, b_folded, *, eps=_LN_EPS, tile_t=None):
    """Fused PreNorm(dim, Linear): Linear(LayerNorm(x)) in ONE pallas_call.
    Build w_folded/b_folded once with fold_prenorm_linear_params()."""
    orig_shape = x.shape
    d_in = orig_shape[-1]
    d_out = w_folded.shape[1]
    x2d = x.reshape(-1, d_in)
    T = x2d.shape[0]
    vmem_limit, vmem_budget = _vmem_limits()
    if tile_t is None:
        tile_t = _choose_tile_t(T, d_in, d_out, x2d.dtype, x2d.dtype, vmem_budget)
    grid = (pl.cdiv(T, tile_t),)

    itemsize = x2d.dtype.itemsize
    flops = 2 * T * d_in * d_out + 7 * T * d_in
    bytes_accessed = (T * d_in * itemsize + T * d_out * itemsize
                      + d_in * d_out * w_folded.dtype.itemsize + d_out * 4)

    out2d = pl.pallas_call(
        functools.partial(_prenorm_linear_kernel, eps=eps),
        out_shape=jax.ShapeDtypeStruct((T, d_out), x2d.dtype),
        grid_spec=pltpu.PrefetchScalarGridSpec(
            num_scalar_prefetch=0,
            grid=grid,
            in_specs=[
                pl.BlockSpec((tile_t, d_in), lambda i: (i, 0)),     # x tile (pipelined)
                pl.BlockSpec((d_in, d_out), lambda i: (0, 0)),      # folded weight (resident)
                pl.BlockSpec((1, d_out), lambda i: (0, 0)),         # folded bias   (resident)
            ],
            out_specs=pl.BlockSpec((tile_t, d_out), lambda i: (i, 0)),
        ),
        compiler_params=pltpu.CompilerParams(
            dimension_semantics=("parallel",),
            vmem_limit_bytes=vmem_limit,
        ),
        cost_estimate=pl.CostEstimate(
            flops=flops, transcendentals=T, bytes_accessed=bytes_accessed),
    )(x2d, w_folded, b_folded)
    return out2d.reshape(orig_shape[:-1] + (d_out,))


# -------------------------- LayerNorm-only kernels --------------------------------
def _layernorm_packed_kernel(x_ref, seg_ref, gamma_ref, beta_ref, o_ref, *, eps, inv_d):
    # x: (tile_tp, 128); every 128-lane row packs 128//D independent LN rows of width D.
    # seg: (128, 128) block-diagonal ones -> x @ seg is each segment's sum broadcast
    # back to every lane of that segment (runs on the otherwise-idle MXU).
    x = x_ref[...].astype(jnp.float32)
    seg = seg_ref[...]
    mean = jnp.dot(x, seg, preferred_element_type=jnp.float32) * inv_d
    centered = x - mean
    var = jnp.dot(centered * centered, seg, preferred_element_type=jnp.float32) * inv_d
    inv = jax.lax.rsqrt(var + eps)
    o_ref[...] = (centered * (inv * gamma_ref[...]) + beta_ref[...]).astype(o_ref.dtype)


def _layernorm_kernel(x_ref, gamma_ref, beta_ref, o_ref, *, eps):
    x = x_ref[...].astype(jnp.float32)                   # (tile_t, D)
    gamma = gamma_ref[...].astype(jnp.float32)
    beta = beta_ref[...].astype(jnp.float32)
    mean = jnp.mean(x, axis=-1, keepdims=True)
    centered = x - mean
    var = jnp.mean(centered * centered, axis=-1, keepdims=True)
    inv = jax.lax.rsqrt(var + eps)
    o_ref[...] = (centered * (inv * gamma) + beta).astype(o_ref.dtype)


def layernorm_pallas(x2d, gamma, beta, *, eps=_LN_EPS, tile_t=None):
    """Tiled LayerNorm over the last dim.  Lane-dense packed path when 128 % D == 0."""
    T, D = x2d.shape
    vmem_limit, vmem_budget = _vmem_limits()
    itemsize = x2d.dtype.itemsize

    pack = (D <= 128) and (128 % D == 0) and ((T * D) % 128 == 0)
    if pack:
        S = 128 // D
        Tp = (T * D) // 128
        xp = x2d.reshape(Tp, 128)                         # free: contiguous row-major view
        seg = jnp.kron(jnp.eye(S, dtype=jnp.float32),
                       jnp.ones((D, D), dtype=jnp.float32))          # (128, 128)
        gamma_l = jnp.tile(jnp.asarray(gamma, jnp.float32).reshape(-1), S).reshape(1, 128)
        beta_l = jnp.tile(jnp.asarray(beta, jnp.float32).reshape(-1), S).reshape(1, 128)
        if tile_t is None:
            tile_tp = _choose_tile_t(Tp, 128, 128, x2d.dtype, x2d.dtype, vmem_budget)
        else:
            tile_tp = min(Tp, max(8, ((tile_t // S) // 8) * 8))
        grid = (pl.cdiv(Tp, tile_tp),)
        out_p = pl.pallas_call(
            functools.partial(_layernorm_packed_kernel, eps=eps, inv_d=1.0 / D),
            out_shape=jax.ShapeDtypeStruct((Tp, 128), x2d.dtype),
            grid_spec=pltpu.PrefetchScalarGridSpec(
                num_scalar_prefetch=0,
                grid=grid,
                in_specs=[
                    pl.BlockSpec((tile_tp, 128), lambda i: (i, 0)),   # packed x tile
                    pl.BlockSpec((128, 128), lambda i: (0, 0)),       # segment-sum matrix
                    pl.BlockSpec((1, 128), lambda i: (0, 0)),         # gamma (tiled to 128)
                    pl.BlockSpec((1, 128), lambda i: (0, 0)),         # beta  (tiled to 128)
                ],
                out_specs=pl.BlockSpec((tile_tp, 128), lambda i: (i, 0)),
            ),
            compiler_params=pltpu.CompilerParams(
                dimension_semantics=("parallel",),
                vmem_limit_bytes=vmem_limit,
            ),
            cost_estimate=pl.CostEstimate(
                flops=4 * Tp * 128 * 128 + 6 * T * D,
                transcendentals=T,
                bytes_accessed=2 * T * D * itemsize + 128 * 128 * 4 + 2 * 128 * 4),
        )(xp, seg, gamma_l, beta_l)
        return out_p.reshape(T, D)

    # Fallback: straightforward (tile_t, D) layout (D does not divide 128 cleanly).
    if tile_t is None:
        tile_t = _choose_tile_t(T, D, D, x2d.dtype, x2d.dtype, vmem_budget)
    grid = (pl.cdiv(T, tile_t),)
    gamma2d = jnp.asarray(gamma, jnp.float32).reshape(1, D)
    beta2d = jnp.asarray(beta, jnp.float32).reshape(1, D)
    return pl.pallas_call(
        functools.partial(_layernorm_kernel, eps=eps),
        out_shape=jax.ShapeDtypeStruct((T, D), x2d.dtype),
        grid_spec=pltpu.PrefetchScalarGridSpec(
            num_scalar_prefetch=0,
            grid=grid,
            in_specs=[
                pl.BlockSpec((tile_t, D), lambda i: (i, 0)),
                pl.BlockSpec((1, D), lambda i: (0, 0)),
                pl.BlockSpec((1, D), lambda i: (0, 0)),
            ],
            out_specs=pl.BlockSpec((tile_t, D), lambda i: (i, 0)),
        ),
        compiler_params=pltpu.CompilerParams(
            dimension_semantics=("parallel",),
            vmem_limit_bytes=vmem_limit,
        ),
        cost_estimate=pl.CostEstimate(
            flops=8 * T * D, transcendentals=T,
            bytes_accessed=2 * T * D * itemsize + 2 * D * 4),
    )(x2d, gamma2d, beta2d)


# ----------------------------------- PreNorm --------------------------------------
def pre_norm(x, gamma, beta, fn, *, eps=_LN_EPS, tile_t=None, **kwargs):
    """Generic PreNorm: fn(LayerNorm(x), **kwargs), LayerNorm in a tiled Pallas kernel.
    When fn is a Linear (e.g. to_qkv or the first FFN Linear), use
    prenorm_linear_pallas + fold_prenorm_linear_params instead — it fuses the matmul
    into the same kernel and avoids an HBM round trip of the LN output."""
    orig_shape = x.shape
    D = orig_shape[-1]
    y = layernorm_pallas(x.reshape(-1, D), gamma, beta, eps=eps, tile_t=tile_t)
    # TODO(synk): arbitrary (non-Linear) fn bodies still run as plain JAX here.
    return fn(y.reshape(orig_shape), **kwargs)


# ------------------------------------- demo ----------------------------------------
if __name__ == "__main__":
    key = jax.random.PRNGKey(0)
    k_x, k_g, k_b, k_w, k_wb, k_x2, k_g2, k_b2 = jax.random.split(key, 8)

    # PreNorm(dim, fn) with fn = MobileViT Attention's QKV projection
    # (heads=2, dim_head=64 -> inner=128, Dout = 3*inner = 384 -> lane-dense output).
    B, N, D = 2, 256, 64
    inner = 128
    d_out = 3 * inner

    x = jax.random.normal(k_x, (B, N, D), dtype=jnp.float32)
    gamma = 1.0 + 0.1 * jax.random.normal(k_g, (D,), dtype=jnp.float32)
    beta = 0.1 * jax.random.normal(k_b, (D,), dtype=jnp.float32)
    w_qkv = 0.05 * jax.random.normal(k_w, (d_out, D), dtype=jnp.float32)   # nn.Linear layout
    b_qkv = 0.05 * jax.random.normal(k_wb, (d_out,), dtype=jnp.float32)

    # One-time parameter setup: transpose the weight and fold gamma/beta into it.
    w_folded, b_folded = fold_prenorm_linear_params(gamma, beta, w_qkv, b_qkv)

    # Fused PreNorm + QKV Linear in one pallas_call.
    out = prenorm_linear_pallas(x, w_folded, b_folded)
    out = jax.block_until_ready(out)

    # Generic PreNorm path (arbitrary fn; identity shows the raw LayerNorm output).
    # D=64 divides 128 -> lane-dense packed LayerNorm kernel.
    ln_out = pre_norm(x, gamma, beta, lambda y: y)
    ln_out = jax.block_until_ready(ln_out)

    # A dim that does NOT divide 128 exercises the fallback LayerNorm kernel.
    B2, N2, D2 = 2, 64, 96
    x2 = jax.random.normal(k_x2, (B2, N2, D2), dtype=jnp.float32)
    gamma2 = 1.0 + 0.1 * jax.random.normal(k_g2, (D2,), dtype=jnp.float32)
    beta2 = 0.1 * jax.random.normal(k_b2, (D2,), dtype=jnp.float32)
    ln_out2 = pre_norm(x2, gamma2, beta2, lambda y: y)
    ln_out2 = jax.block_until_ready(ln_out2)

    # ----------------------- plain-JAX reference checks -----------------------
    def ln_ref_fn(v, g, b):
        m = jnp.mean(v, axis=-1, keepdims=True)
        var = jnp.mean((v - m) ** 2, axis=-1, keepdims=True)
        return (v - m) / jnp.sqrt(var + _LN_EPS) * g + b

    ln_ref = ln_ref_fn(x, gamma, beta)
    ref = ln_ref @ w_qkv.T + b_qkv
    ln_ref2 = ln_ref_fn(x2, gamma2, beta2)

    assert out.shape == (B, N, d_out)
    assert ln_out.shape == (B, N, D)
    assert ln_out2.shape == (B2, N2, D2)
    assert jnp.max(jnp.abs(ln_out - ln_ref)) < 1e-3
    assert jnp.max(jnp.abs(ln_out2 - ln_ref2)) < 1e-3
    assert jnp.max(jnp.abs(out - ref)) < 2e-3

    print("KERNEL_OK")
</pallas_src>

<mosaic_0001>
module attributes {stable_mosaic.version = 11 : i64} {
  func.func @_prenorm_linear_kernel(%arg0: i32, %arg1: memref<256x64xf32, #tpu.memory_space<vmem>>, %arg2: memref<64x384xf32, #tpu.memory_space<vmem>>, %arg3: memref<1x384xf32, #tpu.memory_space<vmem>>, %arg4: memref<256x384xf32, #tpu.memory_space<vmem>>) attributes {dimension_semantics = [#tpu.dimension_semantics<parallel>], iteration_bounds = array<i64: 2>, scalar_prefetch = 0 : i64, scratch_operands = 0 : i64, tpu.core_type = #tpu.core_type<tc>, window_params = [{transform_indices = @transform_0, window_bounds = array<i64: 256, 64>}, {pipeline_mode = #tpu.pipeline_mode<synchronous>, transform_indices = @transform_1, window_bounds = array<i64: 64, 384>}, {pipeline_mode = #tpu.pipeline_mode<synchronous>, transform_indices = @transform_2, window_bounds = array<i64: 1, 384>}, {transform_indices = @transform_3, window_bounds = array<i64: 256, 384>}]} {
    %c0 = arith.constant 0 : index
    %c0_0 = arith.constant 0 : index
    %0 = vector.load %arg1[%c0, %c0_0] : memref<256x64xf32, #tpu.memory_space<vmem>>, vector<256x64xf32>
    %cst = arith.constant dense<0.000000e+00> : vector<256xf32>
    %1 = vector.multi_reduction <add>, %0, %cst [1] : vector<256x64xf32> to vector<256xf32>
    %2 = vector.shape_cast %1 : vector<256xf32> to vector<256x1xf32>
    %cst_1 = arith.constant 6.400000e+01 : f32
    %3 = vector.broadcast %cst_1 : f32 to vector<256x1xf32>
    %4 = arith.divf %2, %3 : vector<256x1xf32>
    %5 = vector.broadcast %4 : vector<256x1xf32> to vector<256x64xf32>
    %6 = arith.subf %0, %5 : vector<256x64xf32>
    %7 = arith.mulf %6, %6 : vector<256x64xf32>
    %cst_2 = arith.constant dense<0.000000e+00> : vector<256xf32>
    %8 = vector.multi_reduction <add>, %7, %cst_2 [1] : vector<256x64xf32> to vector<256xf32>
    %9 = vector.shape_cast %8 : vector<256xf32> to vector<256x1xf32>
    %cst_3 = arith.constant 6.400000e+01 : f32
    %10 = vector.broadcast %cst_3 : f32 to vector<256x1xf32>
    %11 = arith.divf %9, %10 : vector<256x1xf32>
    %cst_4 = arith.constant 9.99999974E-6 : f32
    %12 = vector.broadcast %cst_4 : f32 to vector<256x1xf32>
    %13 = arith.addf %11, %12 : vector<256x1xf32>
    %14 = math.rsqrt %13 : vector<256x1xf32>
    %15 = vector.broadcast %14 : vector<256x1xf32> to vector<256x64xf32>
    %16 = arith.mulf %6, %15 : vector<256x64xf32>
    %c0_5 = arith.constant 0 : index
    %c0_6 = arith.constant 0 : index
    %17 = vector.load %arg2[%c0_5, %c0_6] : memref<64x384xf32, #tpu.memory_space<vmem>>, vector<64x384xf32>
    %cst_7 = arith.constant dense<0.000000e+00> : vector<256x384xf32>
    %18 = tpu.matmul %16, %17, %cst_7 {dimension_numbers = #tpu.dot_dimension_numbers<[1], [0], [0], [1], [0, 0, 1, 1], [], []>} : vector<256x64xf32>, vector<64x384xf32>, vector<256x384xf32> -> vector<256x384xf32>
    %c0_8 = arith.constant 0 : index
    %c0_9 = arith.constant 0 : index
    %19 = vector.load %arg3[%c0_8, %c0_9] : memref<1x384xf32, #tpu.memory_space<vmem>>, vector<1x384xf32>
    %20 = vector.broadcast %19 : vector<1x384xf32> to vector<256x384xf32>
    %21 = arith.addf %18, %20 : vector<256x384xf32>
    %c0_10 = arith.constant 0 : index
    %c0_11 = arith.constant 0 : index
    %22 = vector.load %arg4[%c0_10, %c0_11] : memref<256x384xf32, #tpu.memory_space<vmem>>, vector<256x384xf32>
    tpu.vector_store %arg4[%c0_10, %c0_11], %21 {strides = array<i32>} : memref<256x384xf32, #tpu.memory_space<vmem>>, vector<256x384xf32>,
    return
  }
  func.func @transform_0(%arg0: i32) -> (i32, i32) {
    %c0_i32 = arith.constant 0 : i32
    %c0_i32_0 = arith.constant 0 : i32
    return %arg0, %c0_i32 : i32, i32
  }
  func.func @transform_1(%arg0: i32) -> (i32, i32) {
    %c0_i32 = arith.constant 0 : i32
    %c0_i32_0 = arith.constant 0 : i32
    %c0_i32_1 = arith.constant 0 : i32
    return %c0_i32, %c0_i32_0 : i32, i32
  }
  func.func @transform_2(%arg0: i32) -> (i32, i32) {
    %c0_i32 = arith.constant 0 : i32
    %c0_i32_0 = arith.constant 0 : i32
    %c0_i32_1 = arith.constant 0 : i32
    return %c0_i32, %c0_i32_0 : i32, i32
  }
  func.func @transform_3(%arg0: i32) -> (i32, i32) {
    %c0_i32 = arith.constant 0 : i32
    %c0_i32_0 = arith.constant 0 : i32
    return %arg0, %c0_i32 : i32, i32
  }
}

</mosaic_0001>

<llo_original>
// kernel: tpu_custom_call.1
$region0: #{tpu_custom_call.1}
  #allocation0 [shape = 'u32[]', space=smem, size = 0x4, offset = 0x4, fixed_abs, tag = 'smem constant byte address 0x4 - core index']
  #allocation1 [shape = 'u32[144,128]{1,0:T(1,128)}', space=vmem, size = 0x12000, scoped, tag = 'internal scratch']
  %s0 = inlined_call_operand.vmem [shape: f32[512,64], index: 0, kind: input, shape index: {}]
  %s1 = inlined_call_operand.vmem [shape: f32[64,384], index: 1, kind: input, shape index: {}]
  %s2 = inlined_call_operand.vmem [shape: f32[1,384], index: 2, kind: input, shape index: {}]
  %s3 = inlined_call_operand.hbm [shape: f32[512,384], index: 3, kind: output, shape index: {}]
  %s4 = sld [smem:[#allocation0]]
  $region45: #{tpu_custom_call.1} parent=0
    _
  %s6 = ssub.s32 1, %s4
  %s7 = scalar_select 0, %s6, %s4
  $region1: #{tpu_custom_call.1} parent=0
    #allocation2 [shape = 'u8[786432]{0}', space=vmem, size = 0xc0000, scoped, tag = 'output window, operand 0']
    #allocation3 [shape = 's32[2]{0}', space=sflag, size = 0x8, scoped, tag = 'scoped memory for tpu_custom_call.1']
    %8 = vsyncpa [#allocation3], 0
    %s9 = scalar_lea.sflag [#allocation3], 1
    %10 = vsyncpa %s9, 0
    loop: start=0, step=1, limit=4
    $region2: #{tpu_custom_call.1} parent=1 // loop_pre_header
      _
    $region3: #{tpu_custom_call.1} parent=1 // loop_header
      %s12 = sphi 0, %s16
      %p13 = scmp.ge.s32.totalorder %s12, 4
      %s22 = sphi 0, %s24
      %s25 = sphi 0, %s22
      %s26 = sphi 0, %s25
      %s42 = sphi 0, %s26
      %s46 = sphi 0, %s46
      %s48 = sphi 0, %s46
      %s49 = sphi 0, %s48
      %s63 = sphi 0, %s49
      %s67 = sphi 0, %s67
      %s69 = sphi 0, %s67
      %s70 = sphi 0, %s69
      %s84 = sphi 0, %s70
      %s90 = sphi 0, %s92
      %s93 = sphi 0, %s90
      %s94 = sphi 0, %s93
      %s110 = sphi 0, %s94
    $region4: #{tpu_custom_call.1} parent=1 // loop_header_branch
      %15 = sbr.rel (%p13) target = $region8
    $region5: #{tpu_custom_call.1} parent=1 // loop_body
      %s17 = ssub.s32 %s12, 1
      %s18 = ssub.s32 %s12, 2
      %s19 = sadd.s32 %s12, 1
      %s20 = ssub.s32 %s12, %s19
      %p21 = scmp.eq.s32.totalorder %s20, 0
      %s23 = sadd.s32 %s22, 1
      %s24 = scalar_select %p21, %s22, %s23
      %p27 = pneg %p21
      %p28 = scmp.eq.s32.totalorder %s12, 1
      %p29 = por %p27, %p28
      %p30 = scmp.ne.s32.totalorder %s22, %s25
      %p31 = scmp.eq.s32.totalorder %s12, 0
      %p32 = por %p30, %p31
      %p33 = scmp.ne.s32.totalorder %s22, %s25
      %p34 = scmp.eq.s32.totalorder %s17, 1
      %p35 = por %p33, %p34
      %p36 = scmp.ne.s32.totalorder %s25, %s26
      %p37 = scmp.eq.s32.totalorder %s17, 0
      %p38 = por %p36, %p37
      %p39 = scmp.ne.s32.totalorder %s25, %s26
      %p40 = scmp.eq.s32.totalorder %s18, 1
      %p41 = por %p39, %p40
      %p43 = scmp.ne.s32.totalorder %s26, %s42
      %p44 = scmp.eq.s32.totalorder %s18, 0
      %p45 = por %p43, %p44
      %s47 = sadd.s32 %s46, 1
      %p50 = scmp.eq.s32.totalorder %s12, 1
      %p51 = scmp.ne.s32.totalorder %s46, %s48
      %p52 = scmp.eq.s32.totalorder %s12, 0
      %p53 = por %p51, %p52
      %p54 = scmp.ne.s32.totalorder %s46, %s48
      %p55 = scmp.eq.s32.totalorder %s17, 1
      %p56 = por %p54, %p55
      %p57 = scmp.ne.s32.totalorder %s48, %s49
      %p58 = scmp.eq.s32.totalorder %s17, 0
      %p59 = por %p57, %p58
      %p60 = scmp.ne.s32.totalorder %s48, %s49
      %p61 = scmp.eq.s32.totalorder %s18, 1
      %p62 = por %p60, %p61
      %p64 = scmp.ne.s32.totalorder %s49, %s63
      %p65 = scmp.eq.s32.totalorder %s18, 0
      %p66 = por %p64, %p65
      %s68 = sadd.s32 %s67, 1
      %p71 = scmp.eq.s32.totalorder %s12, 1
      %p72 = scmp.ne.s32.totalorder %s67, %s69
      %p73 = scmp.eq.s32.totalorder %s12, 0
      %p74 = por %p72, %p73
      %p75 = scmp.ne.s32.totalorder %s67, %s69
      %p76 = scmp.eq.s32.totalorder %s17, 1
      %p77 = por %p75, %p76
      %p78 = scmp.ne.s32.totalorder %s69, %s70
      %p79 = scmp.eq.s32.totalorder %s17, 0
      %p80 = por %p78, %p79
      %p81 = scmp.ne.s32.totalorder %s69, %s70
      %p82 = scmp.eq.s32.totalorder %s18, 1
      %p83 = por %p81, %p82
      %p85 = scmp.ne.s32.totalorder %s70, %s84
      %p86 = scmp.eq.s32.totalorder %s18, 0
      %p87 = por %p85, %p86
      %s88 = ssub.s32 %s12, %s19
      %p89 = scmp.eq.s32.totalorder %s88, 0
      %s91 = sadd.s32 %s90, 1
      %s92 = scalar_select %p89, %s90, %s91
      %p95 = pneg %p89
      %p96 = scmp.eq.s32.totalorder %s12, 1
      %p97 = por %p95, %p96
      %p98 = scmp.ne.s32.totalorder %s90, %s93
      %p99 = scmp.eq.s32.totalorder %s12, 0
      %p100 = por %p98, %p99
      %p101 = scmp.ne.s32.totalorder %s90, %s93
      %p102 = scmp.eq.s32.totalorder %s17, 1
      %p103 = por %p101, %p102
      %p104 = scmp.ne.s32.totalorder %s93, %s94
      %p105 = scmp.eq.s32.totalorder %s17, 0
      %p106 = por %p104, %p105
      %p107 = scmp.ne.s32.totalorder %s93, %s94
      %p108 = scmp.eq.s32.totalorder %s18, 1
      %p109 = por %p107, %p108
      %p111 = scmp.ne.s32.totalorder %s94, %s110
      %p112 = scmp.eq.s32.totalorder %s18, 0
      %p113 = por %p111, %p112
      %p114 = scmp.le.s32.totalorder 1, %s12
      %p115 = scmp.lt.s32.totalorder %s12, 3
      %p116 = pnand %p114, %p115
      %p117 = pneg %p116
      // Predicated region
      $region9: #{tpu_custom_call.1} parent=5 // pred_check
        _
      $region10: #{tpu_custom_call.1} parent=5 // pred_check_branch
        %119 = sbr.rel (%p116) target = $region12
      $region11: #{tpu_custom_call.1} parent=5 // pred_region
        %s120 = ssub.s32 %s12, 1
        // Predicated region
        $region13: #{tpu_custom_call.1} parent=11 // pred_check
          %p121 = pneg %p59
        $region14: #{tpu_custom_call.1} parent=11 // pred_check_branch
          %123 = sbr.rel (%p121) target = $region16
        $region15: #{tpu_custom_call.1} parent=11 // pred_region
          _
        $region16: #{tpu_custom_call.1} parent=11 // pred_fallthru
          _
        // Predicated region
        $region17: #{tpu_custom_call.1} parent=11 // pred_check
          %p124 = pneg %p80
        $region18: #{tpu_custom_call.1} parent=11 // pred_check_branch
          %126 = sbr.rel (%p124) target = $region20
        $region19: #{tpu_custom_call.1} parent=11 // pred_region
          _
        $region20: #{tpu_custom_call.1} parent=11 // pred_fallthru
          _
      $region12: #{tpu_custom_call.1} parent=5 // pred_fallthru
        _
      %p127 = scmp.lt.s32.totalorder %s12, 2
      // Predicated region
      $region21: #{tpu_custom_call.1} parent=5 // pred_check
        %p128 = pneg %p127
      $region22: #{tpu_custom_call.1} parent=5 // pred_check_branch
        %130 = sbr.rel (%p128) target = $region24
      $region23: #{tpu_custom_call.1} parent=5 // pred_region
        // Predicated region
        $region25: #{tpu_custom_call.1} parent=23 // pred_check
          %p131 = pneg %p32
        $region26: #{tpu_custom_call.1} parent=23 // pred_check_branch
          %133 = sbr.rel (%p131) target = $region28
        $region27: #{tpu_custom_call.1} parent=23 // pred_region
          %s134 = smul.u32 32, %s12
          %p135 = scmp.lt.s32.totalorder %s134, 63
          %s136 = scalar_select %p135, %s134, 63
          %s137 = smul.addr %s136, 8
          %s138 = scalar_lea.vmem %s0, %s137
          %s139 = smul.u32 32, %s12
        $region28: #{tpu_custom_call.1} parent=23 // pred_fallthru
          _
      $region24: #{tpu_custom_call.1} parent=5 // pred_fallthru
        _
      %p140 = scmp.le.s32.totalorder 1, %s12
      %p141 = scmp.lt.s32.totalorder %s12, 3
      %p142 = pnand %p140, %p141
      %p143 = pneg %p142
      // Predicated region
      $region29: #{tpu_custom_call.1} parent=5 // pred_check
        _
      $region30: #{tpu_custom_call.1} parent=5 // pred_check_branch
        %145 = sbr.rel (%p142) target = $region32
      $region31: #{tpu_custom_call.1} parent=5 // pred_region
        %s146 = ssub.s32 %s12, 1
        %s147 = smul.u32 32, %s17
        %p148 = scmp.lt.s32.totalorder %s147, 63
        %s149 = scalar_select %p148, %s147, 63
        %s150 = smul.addr %s149, 8
        %s151 = scalar_lea.vmem %s0, %s150
        %p152 = pneg %p38
        %p153 = pneg %p35
        %p154 = pneg %p59
        %p155 = pneg %p56
        %p156 = pneg %p80
        %p157 = pneg %p77
        %p158 = pneg %p106
        %p159 = pneg %p103
        %s160 = sand.u32 %s93, 1
        %s161 = scalar_lea.sflag [#allocation3], %s160
        %s162 = sand.u32 %s93, 1
        %s163 = smul.addr %s162, 768
        %s164 = scalar_lea.vmem [#allocation2], %s163
        %s165 = smul.u32 32, %s17
        %p166 = scmp.lt.s32.totalorder %s165, 63
        %s167 = scalar_select %p166, %s165, 63
        %s168 = smul.addr %s167, 8
        %s169 = scalar_lea.vmem %s0, %s168
        %s170 = smul.u32 32, %s17
        %s171 = smul.u32 32, %s17
        %v172 = vld [vmem:[%s169] sm:$0xff]
        %v173 = vld [vmem:[%s169 + $0x8] sm:$0xff]
        %v174 = vld [vmem:[%s169 + $0x10] sm:$0xff]
        %v175 = vld [vmem:[%s169 + $0x18] sm:$0xff]
        %v176 = vld [vmem:[%s169 + $0x20] sm:$0xff]
        %v177 = vld [vmem:[%s169 + $0x28] sm:$0xff]
        %v178 = vld [vmem:[%s169 + $0x30] sm:$0xff]
        %v179 = vld [vmem:[%s169 + $0x38] sm:$0xff]
        %v180 = vld [vmem:[%s169 + $0x40] sm:$0xff]
        %v181 = vld [vmem:[%s169 + $0x48] sm:$0xff]
        %v182 = vld [vmem:[%s169 + $0x50] sm:$0xff]
        %v183 = vld [vmem:[%s169 + $0x58] sm:$0xff]
        %v184 = vld [vmem:[%s169 + $0x60] sm:$0xff]
        %v185 = vld [vmem:[%s169 + $0x68] sm:$0xff]
        %v186 = vld [vmem:[%s169 + $0x70] sm:$0xff]
        %v187 = vld [vmem:[%s169 + $0x78] sm:$0xff]
        %v188 = vld [vmem:[%s169 + $0x80] sm:$0xff]
        %v189 = vld [vmem:[%s169 + $0x88] sm:$0xff]
        %v190 = vld [vmem:[%s169 + $0x90] sm:$0xff]
        %v191 = vld [vmem:[%s169 + $0x98] sm:$0xff]
        %v192 = vld [vmem:[%s169 + $0xa0] sm:$0xff]
        %v193 = vld [vmem:[%s169 + $0xa8] sm:$0xff]
        %v194 = vld [vmem:[%s169 + $0xb0] sm:$0xff]
        %v195 = vld [vmem:[%s169 + $0xb8] sm:$0xff]
        %v196 = vld [vmem:[%s169 + $0xc0] sm:$0xff]
        %v197 = vld [vmem:[%s169 + $0xc8] sm:$0xff]
        %v198 = vld [vmem:[%s169 + $0xd0] sm:$0xff]
        %v199 = vld [vmem:[%s169 + $0xd8] sm:$0xff]
        %v200 = vld [vmem:[%s169 + $0xe0] sm:$0xff]
        %v201 = vld [vmem:[%s169 + $0xe8] sm:$0xff]
        %v202 = vld [vmem:[%s169 + $0xf0] sm:$0xff]
        %v203 = vld [vmem:[%s169 + $0xf8] sm:$0xff]
        %vm204 = vcmask 523264
        %v205 = vsel %vm204, %v172, 0.0
        %206 = vadd.xlane.f32.xlu0 %v205
        %v207 = vpop.xlane.xlu0 %206
        %v208 = vsel %vm204, %v173, 0.0
        %209 = vadd.xlane.f32.xlu0 %v208
        %v210 = vpop.xlane.xlu0 %209
        %v211 = vsel %vm204, %v174, 0.0
        %212 = vadd.xlane.f32.xlu0 %v211
        %v213 = vpop.xlane.xlu0 %212
        %v214 = vsel %vm204, %v175, 0.0
        %215 = vadd.xlane.f32.xlu0 %v214
        %v216 = vpop.xlane.xlu0 %215
        %v217 = vsel %vm204, %v176, 0.0
        %218 = vadd.xlane.f32.xlu0 %v217
        %v219 = vpop.xlane.xlu0 %218
        %v220 = vsel %vm204, %v177, 0.0
        %221 = vadd.xlane.f32.xlu0 %v220
        %v222 = vpop.xlane.xlu0 %221
        %v223 = vsel %vm204, %v178, 0.0
        %224 = vadd.xlane.f32.xlu0 %v223
        %v225 = vpop.xlane.xlu0 %224
        %v226 = vsel %vm204, %v179, 0.0
        %227 = vadd.xlane.f32.xlu0 %v226
        %v228 = vpop.xlane.xlu0 %227
        %v229 = vsel %vm204, %v180, 0.0
        %230 = vadd.xlane.f32.xlu0 %v229
        %v231 = vpop.xlane.xlu0 %230
        %v232 = vsel %vm204, %v181, 0.0
        %233 = vadd.xlane.f32.xlu0 %v232
        %v234 = vpop.xlane.xlu0 %233
        %v235 = vsel %vm204, %v182, 0.0
        %236 = vadd.xlane.f32.xlu0 %v235
        %v237 = vpop.xlane.xlu0 %236
        %v238 = vsel %vm204, %v183, 0.0
        %239 = vadd.xlane.f32.xlu0 %v238
        %v240 = vpop.xlane.xlu0 %239
        %v241 = vsel %vm204, %v184, 0.0
        %242 = vadd.xlane.f32.xlu0 %v241
        %v243 = vpop.xlane.xlu0 %242
        %v244 = vsel %vm204, %v185, 0.0
        %245 = vadd.xlane.f32.xlu0 %v244
        %v246 = vpop.xlane.xlu0 %245
        %v247 = vsel %vm204, %v186, 0.0
        %248 = vadd.xlane.f32.xlu0 %v247
        %v249 = vpop.xlane.xlu0 %248
        %v250 = vsel %vm204, %v187, 0.0
        %251 = vadd.xlane.f32.xlu0 %v250
        %v252 = vpop.xlane.xlu0 %251
        %v253 = vsel %vm204, %v188, 0.0
        %254 = vadd.xlane.f32.xlu0 %v253
        %v255 = vpop.xlane.xlu0 %254
        %v256 = vsel %vm204, %v189, 0.0
        %257 = vadd.xlane.f32.xlu0 %v256
        %v258 = vpop.xlane.xlu0 %257
        %v259 = vsel %vm204, %v190, 0.0
        %260 = vadd.xlane.f32.xlu0 %v259
        %v261 = vpop.xlane.xlu0 %260
        %v262 = vsel %vm204, %v191, 0.0
        %263 = vadd.xlane.f32.xlu0 %v262
        %v264 = vpop.xlane.xlu0 %263
        %v265 = vsel %vm204, %v192, 0.0
        %266 = vadd.xlane.f32.xlu0 %v265
        %v267 = vpop.xlane.xlu0 %266
        %v268 = vsel %vm204, %v193, 0.0
        %269 = vadd.xlane.f32.xlu0 %v268
        %v270 = vpop.xlane.xlu0 %269
        %v271 = vsel %vm204, %v194, 0.0
        %272 = vadd.xlane.f32.xlu0 %v271
        %v273 = vpop.xlane.xlu0 %272
        %v274 = vsel %vm204, %v195, 0.0
        %275 = vadd.xlane.f32.xlu0 %v274
        %v276 = vpop.xlane.xlu0 %275
        %v277 = vsel %vm204, %v196, 0.0
        %278 = vadd.xlane.f32.xlu0 %v277
        %v279 = vpop.xlane.xlu0 %278
        %v280 = vsel %vm204, %v197, 0.0
        %281 = vadd.xlane.f32.xlu0 %v280
        %v282 = vpop.xlane.xlu0 %281
        %v283 = vsel %vm204, %v198, 0.0
        %284 = vadd.xlane.f32.xlu0 %v283
        %v285 = vpop.xlane.xlu0 %284
        %v286 = vsel %vm204, %v199, 0.0
        %287 = vadd.xlane.f32.xlu0 %v286
        %v288 = vpop.xlane.xlu0 %287
        %v289 = vsel %vm204, %v200, 0.0
        %290 = vadd.xlane.f32.xlu0 %v289
        %v291 = vpop.xlane.xlu0 %290
        %v292 = vsel %vm204, %v201, 0.0
        %293 = vadd.xlane.f32.xlu0 %v292
        %v294 = vpop.xlane.xlu0 %293
        %v295 = vsel %vm204, %v202, 0.0
        %296 = vadd.xlane.f32.xlu0 %v295
        %v297 = vpop.xlane.xlu0 %296
        %v298 = vsel %vm204, %v203, 0.0
        %299 = vadd.xlane.f32.xlu0 %v298
        %v300 = vpop.xlane.xlu0 %299
        %v301 = vrcp.pop 64.0
        %v302 = vmul.f32 %v207, %v301
        %v303 = vmul.f32 %v210, %v301
        %v304 = vmul.f32 %v213, %v301
        %v305 = vmul.f32 %v216, %v301
        %v306 = vmul.f32 %v219, %v301
        %v307 = vmul.f32 %v222, %v301
        %v308 = vmul.f32 %v225, %v301
        %v309 = vmul.f32 %v228, %v301
        %v310 = vmul.f32 %v231, %v301
        %v311 = vmul.f32 %v234, %v301
        %v312 = vmul.f32 %v237, %v301
        %v313 = vmul.f32 %v240, %v301
        %v314 = vmul.f32 %v243, %v301
        %v315 = vmul.f32 %v246, %v301
        %v316 = vmul.f32 %v249, %v301
        %v317 = vmul.f32 %v252, %v301
        %v318 = vmul.f32 %v255, %v301
        %v319 = vmul.f32 %v258, %v301
        %v320 = vmul.f32 %v261, %v301
        %v321 = vmul.f32 %v264, %v301
        %v322 = vmul.f32 %v267, %v301
        %v323 = vmul.f32 %v270, %v301
        %v324 = vmul.f32 %v273, %v301
        %v325 = vmul.f32 %v276, %v301
        %v326 = vmul.f32 %v279, %v301
        %v327 = vmul.f32 %v282, %v301
        %v328 = vmul.f32 %v285, %v301
        %v329 = vmul.f32 %v288, %v301
        %v330 = vmul.f32 %v291, %v301
        %v331 = vmul.f32 %v294, %v301
        %v332 = vmul.f32 %v297, %v301
        %v333 = vmul.f32 %v300, %v301
        %v334 = vsub.f32 %v172, %v302
        %v335 = vsub.f32 %v173, %v303
        %v336 = vsub.f32 %v174, %v304
        %v337 = vsub.f32 %v175, %v305
        %v338 = vsub.f32 %v176, %v306
        %v339 = vsub.f32 %v177, %v307
        %v340 = vsub.f32 %v178, %v308
        %v341 = vsub.f32 %v179, %v309
        %v342 = vsub.f32 %v180, %v310
        %v343 = vsub.f32 %v181, %v311
        %v344 = vsub.f32 %v182, %v312
        %v345 = vsub.f32 %v183, %v313
        %v346 = vsub.f32 %v184, %v314
        %v347 = vsub.f32 %v185, %v315
        %v348 = vsub.f32 %v186, %v316
        %v349 = vsub.f32 %v187, %v317
        %v350 = vsub.f32 %v188, %v318
        %v351 = vsub.f32 %v189, %v319
        %v352 = vsub.f32 %v190, %v320
        %v353 = vsub.f32 %v191, %v321
        %v354 = vsub.f32 %v192, %v322
        %v355 = vsub.f32 %v193, %v323
        %v356 = vsub.f32 %v194, %v324
        %v357 = vsub.f32 %v195, %v325
        %v358 = vsub.f32 %v196, %v326
        %v359 = vsub.f32 %v197, %v327
        %v360 = vsub.f32 %v198, %v328
        %v361 = vsub.f32 %v199, %v329
        %v362 = vsub.f32 %v200, %v330
        %v363 = vsub.f32 %v201, %v331
        %v364 = vsub.f32 %v202, %v332
        %v365 = vsub.f32 %v203, %v333
        %v366 = vmul.f32 %v334, %v334
        %v367 = vmul.f32 %v335, %v335
        %v368 = vmul.f32 %v336, %v336
        %v369 = vmul.f32 %v337, %v337
        %v370 = vmul.f32 %v338, %v338
        %v371 = vmul.f32 %v339, %v339
        %v372 = vmul.f32 %v340, %v340
        %v373 = vmul.f32 %v341, %v341
        %v374 = vmul.f32 %v342, %v342
        %v375 = vmul.f32 %v343, %v343
        %v376 = vmul.f32 %v344, %v344
        %v377 = vmul.f32 %v345, %v345
        %v378 = vmul.f32 %v346, %v346
        %v379 = vmul.f32 %v347, %v347
        %v380 = vmul.f32 %v348, %v348
        %v381 = vmul.f32 %v349, %v349
        %v382 = vmul.f32 %v350, %v350
        %v383 = vmul.f32 %v351, %v351
        %v384 = vmul.f32 %v352, %v352
        %v385 = vmul.f32 %v353, %v353
        %v386 = vmul.f32 %v354, %v354
        %v387 = vmul.f32 %v355, %v355
        %v388 = vmul.f32 %v356, %v356
        %v389 = vmul.f32 %v357, %v357
        %v390 = vmul.f32 %v358, %v358
        %v391 = vmul.f32 %v359, %v359
        %v392 = vmul.f32 %v360, %v360
        %v393 = vmul.f32 %v361, %v361
        %v394 = vmul.f32 %v362, %v362
        %v395 = vmul.f32 %v363, %v363
        %v396 = vmul.f32 %v364, %v364
        %v397 = vmul.f32 %v365, %v365
        %v398 = vsel %vm204, %v366, 0.0
        %399 = vadd.xlane.f32.xlu0 %v398
        %v400 = vpop.xlane.xlu0 %399
        %v401 = vsel %vm204, %v367, 0.0
        %402 = vadd.xlane.f32.xlu0 %v401
        %v403 = vpop.xlane.xlu0 %402
        %v404 = vsel %vm204, %v368, 0.0
        %405 = vadd.xlane.f32.xlu0 %v404
        %v406 = vpop.xlane.xlu0 %405
        %v407 = vsel %vm204, %v369, 0.0
        %408 = vadd.xlane.f32.xlu0 %v407
        %v409 = vpop.xlane.xlu0 %408
        %v410 = vsel %vm204, %v370, 0.0
        %411 = vadd.xlane.f32.xlu0 %v410
        %v412 = vpop.xlane.xlu0 %411
        %v413 = vsel %vm204, %v371, 0.0
        %414 = vadd.xlane.f32.xlu0 %v413
        %v415 = vpop.xlane.xlu0 %414
        %v416 = vsel %vm204, %v372, 0.0
        %417 = vadd.xlane.f32.xlu0 %v416
        %v418 = vpop.xlane.xlu0 %417
        %v419 = vsel %vm204, %v373, 0.0
        %420 = vadd.xlane.f32.xlu0 %v419
        %v421 = vpop.xlane.xlu0 %420
        %v422 = vsel %vm204, %v374, 0.0
        %423 = vadd.xlane.f32.xlu0 %v422
        %v424 = vpop.xlane.xlu0 %423
        %v425 = vsel %vm204, %v375, 0.0
        %426 = vadd.xlane.f32.xlu0 %v425
        %v427 = vpop.xlane.xlu0 %426
        %v428 = vsel %vm204, %v376, 0.0
        %429 = vadd.xlane.f32.xlu0 %v428
        %v430 = vpop.xlane.xlu0 %429
        %v431 = vsel %vm204, %v377, 0.0
        %432 = vadd.xlane.f32.xlu0 %v431
        %v433 = vpop.xlane.xlu0 %432
        %v434 = vsel %vm204, %v378, 0.0
        %435 = vadd.xlane.f32.xlu0 %v434
        %v436 = vpop.xlane.xlu0 %435
        %v437 = vsel %vm204, %v379, 0.0
        %438 = vadd.xlane.f32.xlu0 %v437
        %v439 = vpop.xlane.xlu0 %438
        %v440 = vsel %vm204, %v380, 0.0
        %441 = vadd.xlane.f32.xlu0 %v440
        %v442 = vpop.xlane.xlu0 %441
        %v443 = vsel %vm204, %v381, 0.0
        %444 = vadd.xlane.f32.xlu0 %v443
        %v445 = vpop.xlane.xlu0 %444
        %v446 = vsel %vm204, %v382, 0.0
        %447 = vadd.xlane.f32.xlu0 %v446
        %v448 = vpop.xlane.xlu0 %447
        %v449 = vsel %vm204, %v383, 0.0
        %450 = vadd.xlane.f32.xlu0 %v449
        %v451 = vpop.xlane.xlu0 %450
        %v452 = vsel %vm204, %v384, 0.0
        %453 = vadd.xlane.f32.xlu0 %v452
        %v454 = vpop.xlane.xlu0 %453
        %v455 = vsel %vm204, %v385, 0.0
        %456 = vadd.xlane.f32.xlu0 %v455
        %v457 = vpop.xlane.xlu0 %456
        %v458 = vsel %vm204, %v386, 0.0
        %459 = vadd.xlane.f32.xlu0 %v458
        %v460 = vpop.xlane.xlu0 %459
        %v461 = vsel %vm204, %v387, 0.0
        %462 = vadd.xlane.f32.xlu0 %v461
        %v463 = vpop.xlane.xlu0 %462
        %v464 = vsel %vm204, %v388, 0.0
        %465 = vadd.xlane.f32.xlu0 %v464
        %v466 = vpop.xlane.xlu0 %465
        %v467 = vsel %vm204, %v389, 0.0
        %468 = vadd.xlane.f32.xlu0 %v467
        %v469 = vpop.xlane.xlu0 %468
        %v470 = vsel %vm204, %v390, 0.0
        %471 = vadd.xlane.f32.xlu0 %v470
        %v472 = vpop.xlane.xlu0 %471
        %v473 = vsel %vm204, %v391, 0.0
        %474 = vadd.xlane.f32.xlu0 %v473
        %v475 = vpop.xlane.xlu0 %474
        %v476 = vsel %vm204, %v392, 0.0
        %477 = vadd.xlane.f32.xlu0 %v476
        %v478 = vpop.xlane.xlu0 %477
        %v479 = vsel %vm204, %v393, 0.0
        %480 = vadd.xlane.f32.xlu0 %v479
        %v481 = vpop.xlane.xlu0 %480
        %v482 = vsel %vm204, %v394, 0.0
        %483 = vadd.xlane.f32.xlu0 %v482
        %v484 = vpop.xlane.xlu0 %483
        %v485 = vsel %vm204, %v395, 0.0
        %486 = vadd.xlane.f32.xlu0 %v485
        %v487 = vpop.xlane.xlu0 %486
        %v488 = vsel %vm204, %v396, 0.0
        %489 = vadd.xlane.f32.xlu0 %v488
        %v490 = vpop.xlane.xlu0 %489
        %v491 = vsel %vm204, %v397, 0.0
        %492 = vadd.xlane.f32.xlu0 %v491
        %v493 = vpop.xlane.xlu0 %492
        %v494 = vmul.f32 %v400, %v301
        %v495 = vmul.f32 %v403, %v301
        %v496 = vmul.f32 %v406, %v301
        %v497 = vmul.f32 %v409, %v301
        %v498 = vmul.f32 %v412, %v301
        %v499 = vmul.f32 %v415, %v301
        %v500 = vmul.f32 %v418, %v301
        %v501 = vmul.f32 %v421, %v301
        %v502 = vmul.f32 %v424, %v301
        %v503 = vmul.f32 %v427, %v301
        %v504 = vmul.f32 %v430, %v301
        %v505 = vmul.f32 %v433, %v301
        %v506 = vmul.f32 %v436, %v301
        %v507 = vmul.f32 %v439, %v301
        %v508 = vmul.f32 %v442, %v301
        %v509 = vmul.f32 %v445, %v301
        %v510 = vmul.f32 %v448, %v301
        %v511 = vmul.f32 %v451, %v301
        %v512 = vmul.f32 %v454, %v301
        %v513 = vmul.f32 %v457, %v301
        %v514 = vmul.f32 %v460, %v301
        %v515 = vmul.f32 %v463, %v301
        %v516 = vmul.f32 %v466, %v301
        %v517 = vmul.f32 %v469, %v301
        %v518 = vmul.f32 %v472, %v301
        %v519 = vmul.f32 %v475, %v301
        %v520 = vmul.f32 %v478, %v301
        %v521 = vmul.f32 %v481, %v301
        %v522 = vmul.f32 %v484, %v301
        %v523 = vmul.f32 %v487, %v301
        %v524 = vmul.f32 %v490, %v301
        %v525 = vmul.f32 %v493, %v301
        %v526 = vadd.f32 %v494, 1e-05
        %v527 = vadd.f32 %v495, 1e-05
        %v528 = vadd.f32 %v496, 1e-05
        %v529 = vadd.f32 %v497, 1e-05
        %v530 = vadd.f32 %v498, 1e-05
        %v531 = vadd.f32 %v499, 1e-05
        %v532 = vadd.f32 %v500, 1e-05
        %v533 = vadd.f32 %v501, 1e-05
        %v534 = vadd.f32 %v502, 1e-05
        %v535 = vadd.f32 %v503, 1e-05
        %v536 = vadd.f32 %v504, 1e-05
        %v537 = vadd.f32 %v505, 1e-05
        %v538 = vadd.f32 %v506, 1e-05
        %v539 = vadd.f32 %v507, 1e-05
        %v540 = vadd.f32 %v508, 1e-05
        %v541 = vadd.f32 %v509, 1e-05
        %v542 = vadd.f32 %v510, 1e-05
        %v543 = vadd.f32 %v511, 1e-05
        %v544 = vadd.f32 %v512, 1e-05
        %v545 = vadd.f32 %v513, 1e-05
        %v546 = vadd.f32 %v514, 1e-05
        %v547 = vadd.f32 %v515, 1e-05
        %v548 = vadd.f32 %v516, 1e-05
        %v549 = vadd.f32 %v517, 1e-05
        %v550 = vadd.f32 %v518, 1e-05
        %v551 = vadd.f32 %v519, 1e-05
        %v552 = vadd.f32 %v520, 1e-05
        %v553 = vadd.f32 %v521, 1e-05
        %v554 = vadd.f32 %v522, 1e-05
        %v555 = vadd.f32 %v523, 1e-05
        %v556 = vadd.f32 %v524, 1e-05
        %v557 = vadd.f32 %v525, 1e-05
        %v558 = vrsqrt.pop %v526
        %v559 = vrsqrt.pop %v527
        %v560 = vrsqrt.pop %v528
        %v561 = vrsqrt.pop %v529
        %v562 = vrsqrt.pop %v530
        %v563 = vrsqrt.pop %v531
        %v564 = vrsqrt.pop %v532
        %v565 = vrsqrt.pop %v533
        %v566 = vrsqrt.pop %v534
        %v567 = vrsqrt.pop %v535
        %v568 = vrsqrt.pop %v536
        %v569 = vrsqrt.pop %v537
        %v570 = vrsqrt.pop %v538
        %v571 = vrsqrt.pop %v539
        %v572 = vrsqrt.pop %v540
        %v573 = vrsqrt.pop %v541
        %v574 = vrsqrt.pop %v542
        %v575 = vrsqrt.pop %v543
        %v576 = vrsqrt.pop %v544
        %v577 = vrsqrt.pop %v545
        %v578 = vrsqrt.pop %v546
        %v579 = vrsqrt.pop %v547
        %v580 = vrsqrt.pop %v548
        %v581 = vrsqrt.pop %v549
        %v582 = vrsqrt.pop %v550
        %v583 = vrsqrt.pop %v551
        %v584 = vrsqrt.pop %v552
        %v585 = vrsqrt.pop %v553
        %v586 = vrsqrt.pop %v554
        %v587 = vrsqrt.pop %v555
        %v588 = vrsqrt.pop %v556
        %v589 = vrsqrt.pop %v557
        %v590 = vmul.f32 %v334, %v558
        %v591 = vmul.f32 %v335, %v559
        %v592 = vmul.f32 %v336, %v560
        %v593 = vmul.f32 %v337, %v561
        %v594 = vmul.f32 %v338, %v562
        %v595 = vmul.f32 %v339, %v563
        %v596 = vmul.f32 %v340, %v564
        %v597 = vmul.f32 %v341, %v565
        %v598 = vmul.f32 %v342, %v566
        %v599 = vmul.f32 %v343, %v567
        %v600 = vmul.f32 %v344, %v568
        %v601 = vmul.f32 %v345, %v569
        %v602 = vmul.f32 %v346, %v570
        %v603 = vmul.f32 %v347, %v571
        %v604 = vmul.f32 %v348, %v572
        %v605 = vmul.f32 %v349, %v573
        %v606 = vmul.f32 %v350, %v574
        %v607 = vmul.f32 %v351, %v575
        %v608 = vmul.f32 %v352, %v576
        %v609 = vmul.f32 %v353, %v577
        %v610 = vmul.f32 %v354, %v578
        %v611 = vmul.f32 %v355, %v579
        %v612 = vmul.f32 %v356, %v580
        %v613 = vmul.f32 %v357, %v581
        %v614 = vmul.f32 %v358, %v582
        %v615 = vmul.f32 %v359, %v583
        %v616 = vmul.f32 %v360, %v584
        %v617 = vmul.f32 %v361, %v585
        %v618 = vmul.f32 %v362, %v586
        %v619 = vmul.f32 %v363, %v587
        %v620 = vmul.f32 %v364, %v588
        %v621 = vmul.f32 %v365, %v589
        %v622 = vld [vmem:[%s1] sm:$0xff]
        %v623 = vld [vmem:[%s1 + $0x8] sm:$0xff]
        %v624 = vld [vmem:[%s1 + $0x10] sm:$0xff]
        %v625 = vld [vmem:[%s1 + $0x18] sm:$0xff]
        %v626 = vld [vmem:[%s1 + $0x20] sm:$0xff]
        %v627 = vld [vmem:[%s1 + $0x28] sm:$0xff]
        %v628 = vld [vmem:[%s1 + $0x30] sm:$0xff]
        %v629 = vld [vmem:[%s1 + $0x38] sm:$0xff]
        %v630 = vld [vmem:[%s1 + $0x40] sm:$0xff]
        %v631 = vld [vmem:[%s1 + $0x48] sm:$0xff]
        %v632 = vld [vmem:[%s1 + $0x50] sm:$0xff]
        %v633 = vld [vmem:[%s1 + $0x58] sm:$0xff]
        %v634 = vld [vmem:[%s1 + $0x60] sm:$0xff]
        %v635 = vld [vmem:[%s1 + $0x68] sm:$0xff]
        %v636 = vld [vmem:[%s1 + $0x70] sm:$0xff]
        %v637 = vld [vmem:[%s1 + $0x78] sm:$0xff]
        %v638 = vld [vmem:[%s1 + $0x80] sm:$0xff]
        %v639 = vld [vmem:[%s1 + $0x88] sm:$0xff]
        %v640 = vld [vmem:[%s1 + $0x90] sm:$0xff]
        %v641 = vld [vmem:[%s1 + $0x98] sm:$0xff]
        %v642 = vld [vmem:[%s1 + $0xa0] sm:$0xff]
        %v643 = vld [vmem:[%s1 + $0xa8] sm:$0xff]
        %v644 = vld [vmem:[%s1 + $0xb0] sm:$0xff]
        %v645 = vld [vmem:[%s1 + $0xb8] sm:$0xff]
        %v646 = vld [vmem:[%s2] sm:$0x7]
        %v648 = vlaneseq
        %v649 = vshrl.u32 %v648, 7
        %v650 = vsub.s32 0, %v649
        %v651 = vrot.slane %v646, %v650
        %v652 = vlaneseq
        %v653 = vshrl.u32 %v652, 7
        %v654 = vsub.s32 1, %v653
        %v655 = vrot.slane %v646, %v654
        %v656 = vlaneseq
        %v657 = vshrl.u32 %v656, 7
        %v658 = vsub.s32 2, %v657
        %v659 = vrot.slane %v646, %v658
        %v664 = vsel %vm204, %v590, 0
        %v667 = vsel %vm204, %v591, 0
        %v670 = vsel %vm204, %v592, 0
        %v673 = vsel %vm204, %v593, 0
        %v676 = vsel %vm204, %v594, 0
        %v679 = vsel %vm204, %v595, 0
        %v682 = vsel %vm204, %v596, 0
        %v685 = vsel %vm204, %v597, 0
        %v688 = vsel %vm204, %v598, 0
        %v691 = vsel %vm204, %v599, 0
        %v694 = vsel %vm204, %v600, 0
        %v697 = vsel %vm204, %v601, 0
        %v700 = vsel %vm204, %v602, 0
        %v703 = vsel %vm204, %v603, 0
        %v706 = vsel %vm204, %v604, 0
        %v709 = vsel %vm204, %v605, 0
        %v712 = vsel %vm204, %v606, 0
        %v715 = vsel %vm204, %v607, 0
        %v718 = vsel %vm204, %v608, 0
        %v721 = vsel %vm204, %v609, 0
        %v724 = vsel %vm204, %v610, 0
        %v727 = vsel %vm204, %v611, 0
        %v730 = vsel %vm204, %v612, 0
        %v733 = vsel %vm204, %v613, 0
        %v736 = vsel %vm204, %v614, 0
        %v739 = vsel %vm204, %v615, 0
        %v742 = vsel %vm204, %v616, 0
        %v745 = vsel %vm204, %v617, 0
        %v748 = vsel %vm204, %v618, 0
        %v751 = vsel %vm204, %v619, 0
        %v754 = vsel %vm204, %v620, 0
        %v757 = vsel %vm204, %v621, 0
        %759 = vmatprep.subr.mxu0 %v623
        %760 = vmatpush1.msra.mxu0 %v622
        %761 = vmatprep.subr.mxu0 %v626
        %762 = vmatpush1.msra.mxu0 %v625
        %763 = vmatprep.subr.mxu0 %v629
        %764 = vmatpush1.msra.mxu0 %v628
        %765 = vmatprep.subr.mxu0 %v632
        %766 = vmatpush1.msra.mxu0 %v631
        %767 = vmatprep.subr.mxu0 %v635
        %768 = vmatpush1.msra.mxu0 %v634
        %769 = vmatprep.subr.mxu0 %v638
        %770 = vmatpush1.msra.mxu0 %v637
        %771 = vmatprep.subr.mxu0 %v641
        %772 = vmatpush1.msra.mxu0 %v640
        %773 = vmatprep.subr.mxu0 %v644
        %774 = vmatpush1.msra.mxu0 %v643
        %775 = vmatprep.subr.mxu0 0.0
        %776 = vmatpush1.msra.mxu0 0.0
        %777 = vmatprep.subr.mxu0 0.0
        %778 = vmatpush1.msra.mxu0 0.0
        %779 = vmatprep.subr.mxu0 0.0
        %780 = vmatpush1.msra.mxu0 0.0
        %781 = vmatprep.subr.mxu0 0.0
        %782 = vmatpush1.msra.mxu0 0.0
        %783 = vmatprep.subr.mxu0 0.0
        %784 = vmatpush1.msra.mxu0 0.0
        %785 = vmatprep.subr.mxu0 0.0
        %786 = vmatpush1.msra.mxu0 0.0
        %787 = vmatprep.subr.mxu0 0.0
        %788 = vmatpush1.msra.mxu0 0.0
        %789 = vmatprep.subr.mxu0 0.0
        %790 = vmatpush1.msra.mxu0 0.0
        %791 = vmatprep.subr.mxu0 0.0
        %792 = vmatpush1.msra.mxu0 0.0
        %793 = vmatprep.subr.mxu0 0.0
        %794 = vmatpush1.msra.mxu0 0.0
        %795 = vmatprep.subr.mxu0 0.0
        %796 = vmatpush1.msra.mxu0 0.0
        %797 = vmatprep.subr.mxu0 0.0
        %798 = vmatpush1.msra.mxu0 0.0
        %799 = vmatprep.subr.mxu0 0.0
        %800 = vmatpush1.msra.mxu0 0.0
        %801 = vmatprep.subr.mxu0 0.0
        %802 = vmatpush1.msra.mxu0 0.0
        %803 = vmatprep.subr.mxu0 0.0
        %804 = vmatpush1.msra.mxu0 0.0
        %805 = vmatprep.subr.mxu0 0.0
        %806 = vmatpush1.msra.mxu0 0.0
        %807 = vmatprep.subr.mxu0 0.0
        %808 = vmatpush1.msra.mxu0 0.0
        %809 = vmatprep.subr.mxu0 0.0
        %810 = vmatpush1.msra.mxu0 0.0
        %811 = vmatprep.subr.mxu0 0.0
        %812 = vmatpush1.msra.mxu0 0.0
        %813 = vmatprep.subr.mxu0 0.0
        %814 = vmatpush1.msra.mxu0 0.0
        %815 = vmatprep.subr.mxu0 0.0
        %816 = vmatpush1.msra.mxu0 0.0
        %817 = vmatprep.subr.mxu0 0.0
        %818 = vmatpush1.msra.mxu0 0.0
        %819 = vmatprep.subr.mxu0 0.0
        %820 = vmatpush1.msra.mxu0 0.0
        %821 = vmatprep.subr.mxu0 0.0
        %822 = vmatpush1.msra.mxu0 0.0
        %823 = vmatprep.mubr.f32.mxu0 0.0
        %824 = vmatmul.mubr.f32.gmra.mrb[0].mxu0 %v664
        %v825 = vpop.f32.mrb[0].mxu0
        %v826 = vadd.f32 %v651, %v825
        %v827 = vpop.f32.mrb[0].mxu0
        %v828 = vadd.f32 %v655, %v827
        %829 = vmatprep.mubr.f32.mxu0 0.0
        %830 = vmatmul.mubr.f32.gmra.mrb[0].mxu0 %v667
        %v831 = vpop.f32.mrb[0].mxu0
        %v832 = vadd.f32 %v651, %v831
        %v833 = vpop.f32.mrb[0].mxu0
        %v834 = vadd.f32 %v655, %v833
        %835 = vmatprep.mubr.f32.mxu0 0.0
        %836 = vmatmul.mubr.f32.gmra.mrb[0].mxu0 %v670
        %v837 = vpop.f32.mrb[0].mxu0
        %v838 = vadd.f32 %v651, %v837
        %v839 = vpop.f32.mrb[0].mxu0
        %v840 = vadd.f32 %v655, %v839
        %841 = vmatprep.mubr.f32.mxu0 0.0
        %842 = vmatmul.mubr.f32.gmra.mrb[0].mxu0 %v673
        %v843 = vpop.f32.mrb[0].mxu0
        %v844 = vadd.f32 %v651, %v843
        %v845 = vpop.f32.mrb[0].mxu0
        %v846 = vadd.f32 %v655, %v845
        %847 = vmatprep.mubr.f32.mxu0 0.0
        %848 = vmatmul.mubr.f32.gmra.mrb[0].mxu0 %v676
        %v849 = vpop.f32.mrb[0].mxu0
        %v850 = vadd.f32 %v651, %v849
        %v851 = vpop.f32.mrb[0].mxu0
        %v852 = vadd.f32 %v655, %v851
        %853 = vmatprep.mubr.f32.mxu0 0.0
        %854 = vmatmul.mubr.f32.gmra.mrb[0].mxu0 %v679
        %v855 = vpop.f32.mrb[0].mxu0
        %v856 = vadd.f32 %v651, %v855
        %v857 = vpop.f32.mrb[0].mxu0
        %v858 = vadd.f32 %v655, %v857
        %859 = vmatprep.mubr.f32.mxu0 0.0
        %860 = vmatmul.mubr.f32.gmra.mrb[0].mxu0 %v682
        %v861 = vpop.f32.mrb[0].mxu0
        %v862 = vadd.f32 %v651, %v861
        %v863 = vpop.f32.mrb[0].mxu0
        %v864 = vadd.f32 %v655, %v863
        %865 = vmatprep.mubr.f32.mxu0 0.0
        %866 = vmatmul.mubr.f32.gmra.mrb[0].mxu0 %v685
        %v867 = vpop.f32.mrb[0].mxu0
        %v868 = vadd.f32 %v651, %v867
        %v869 = vpop.f32.mrb[0].mxu0
        %v870 = vadd.f32 %v655, %v869
        %871 = vmatprep.mubr.f32.mxu0 0.0
        %872 = vmatmul.mubr.f32.gmra.mrb[0].mxu0 %v688
        %v873 = vpop.f32.mrb[0].mxu0
        %v874 = vadd.f32 %v651, %v873
        %v875 = vpop.f32.mrb[0].mxu0
        %v876 = vadd.f32 %v655, %v875
        %877 = vmatprep.mubr.f32.mxu0 0.0
        %878 = vmatmul.mubr.f32.gmra.mrb[0].mxu0 %v691
        %v879 = vpop.f32.mrb[0].mxu0
        %v880 = vadd.f32 %v651, %v879
        %v881 = vpop.f32.mrb[0].mxu0
        %v882 = vadd.f32 %v655, %v881
        %883 = vmatprep.mubr.f32.mxu0 0.0
        %884 = vmatmul.mubr.f32.gmra.mrb[0].mxu0 %v694
        %v885 = vpop.f32.mrb[0].mxu0
        %v886 = vadd.f32 %v651, %v885
        %v887 = vpop.f32.mrb[0].mxu0
        %v888 = vadd.f32 %v655, %v887
        %889 = vmatprep.mubr.f32.mxu0 0.0
        %890 = vmatmul.mubr.f32.gmra.mrb[0].mxu0 %v697
        %v891 = vpop.f32.mrb[0].mxu0
        %v892 = vadd.f32 %v651, %v891
        %v893 = vpop.f32.mrb[0].mxu0
        %v894 = vadd.f32 %v655, %v893
        %895 = vmatprep.mubr.f32.mxu0 0.0
        %896 = vmatmul.mubr.f32.gmra.mrb[0].mxu0 %v700
        %v897 = vpop.f32.mrb[0].mxu0
        %v898 = vadd.f32 %v651, %v897
        %v899 = vpop.f32.mrb[0].mxu0
        %v900 = vadd.f32 %v655, %v899
        %901 = vmatprep.mubr.f32.mxu0 0.0
        %902 = vmatmul.mubr.f32.gmra.mrb[0].mxu0 %v703
        %v903 = vpop.f32.mrb[0].mxu0
        %v904 = vadd.f32 %v651, %v903
        %v905 = vpop.f32.mrb[0].mxu0
        %v906 = vadd.f32 %v655, %v905
        %907 = vmatprep.mubr.f32.mxu0 0.0
        %908 = vmatmul.mubr.f32.gmra.mrb[0].mxu0 %v706
        %v909 = vpop.f32.mrb[0].mxu0
        %v910 = vadd.f32 %v651, %v909
        %v911 = vpop.f32.mrb[0].mxu0
        %v912 = vadd.f32 %v655, %v911
        %913 = vmatprep.mubr.f32.mxu0 0.0
        %914 = vmatmul.mubr.f32.gmra.mrb[0].mxu0 %v709
        %v915 = vpop.f32.mrb[0].mxu0
        %v916 = vadd.f32 %v651, %v915
        %v917 = vpop.f32.mrb[0].mxu0
        %v918 = vadd.f32 %v655, %v917
        %919 = vmatprep.mubr.f32.mxu0 0.0
        %920 = vmatmul.mubr.f32.gmra.mrb[0].mxu0 %v712
        %v921 = vpop.f32.mrb[0].mxu0
        %v922 = vadd.f32 %v651, %v921
        %v923 = vpop.f32.mrb[0].mxu0
        %v924 = vadd.f32 %v655, %v923
        %925 = vmatprep.mubr.f32.mxu0 0.0
        %926 = vmatmul.mubr.f32.gmra.mrb[0].mxu0 %v715
        %v927 = vpop.f32.mrb[0].mxu0
        %v928 = vadd.f32 %v651, %v927
        %v929 = vpop.f32.mrb[0].mxu0
        %v930 = vadd.f32 %v655, %v929
        %931 = vmatprep.mubr.f32.mxu0 0.0
        %932 = vmatmul.mubr.f32.gmra.mrb[0].mxu0 %v718
        %v933 = vpop.f32.mrb[0].mxu0
        %v934 = vadd.f32 %v651, %v933
        %v935 = vpop.f32.mrb[0].mxu0
        %v936 = vadd.f32 %v655, %v935
        %937 = vmatprep.mubr.f32.mxu0 0.0
        %938 = vmatmul.mubr.f32.gmra.mrb[0].mxu0 %v721
        %v939 = vpop.f32.mrb[0].mxu0
        %v940 = vadd.f32 %v651, %v939
        %v941 = vpop.f32.mrb[0].mxu0
        %v942 = vadd.f32 %v655, %v941
        %943 = vmatprep.mubr.f32.mxu0 0.0
        %944 = vmatmul.mubr.f32.gmra.mrb[0].mxu0 %v724
        %v945 = vpop.f32.mrb[0].mxu0
        %v946 = vadd.f32 %v651, %v945
        %v947 = vpop.f32.mrb[0].mxu0
        %v948 = vadd.f32 %v655, %v947
        %949 = vmatprep.mubr.f32.mxu0 0.0
        %950 = vmatmul.mubr.f32.gmra.mrb[0].mxu0 %v727
        %v951 = vpop.f32.mrb[0].mxu0
        %v952 = vadd.f32 %v651, %v951
        %v953 = vpop.f32.mrb[0].mxu0
        %v954 = vadd.f32 %v655, %v953
        %955 = vmatprep.mubr.f32.mxu0 0.0
        %956 = vmatmul.mubr.f32.gmra.mrb[0].mxu0 %v730
        %v957 = vpop.f32.mrb[0].mxu0
        %v958 = vadd.f32 %v651, %v957
        %v959 = vpop.f32.mrb[0].mxu0
        %v960 = vadd.f32 %v655, %v959
        %961 = vmatprep.mubr.f32.mxu0 0.0
        %962 = vmatmul.mubr.f32.gmra.mrb[0].mxu0 %v733
        %v963 = vpop.f32.mrb[0].mxu0
        %v964 = vadd.f32 %v651, %v963
        %v965 = vpop.f32.mrb[0].mxu0
        %v966 = vadd.f32 %v655, %v965
        %967 = vmatprep.mubr.f32.mxu0 0.0
        %968 = vmatmul.mubr.f32.gmra.mrb[0].mxu0 %v736
        %v969 = vpop.f32.mrb[0].mxu0
        %v970 = vadd.f32 %v651, %v969
        %v971 = vpop.f32.mrb[0].mxu0
        %v972 = vadd.f32 %v655, %v971
        %973 = vmatprep.mubr.f32.mxu0 0.0
        %974 = vmatmul.mubr.f32.gmra.mrb[0].mxu0 %v739
        %v975 = vpop.f32.mrb[0].mxu0
        %v976 = vadd.f32 %v651, %v975
        %v977 = vpop.f32.mrb[0].mxu0
        %v978 = vadd.f32 %v655, %v977
        %979 = vmatprep.mubr.f32.mxu0 0.0
        %980 = vmatmul.mubr.f32.gmra.mrb[0].mxu0 %v742
        %v981 = vpop.f32.mrb[0].mxu0
        %v982 = vadd.f32 %v651, %v981
        %v983 = vpop.f32.mrb[0].mxu0
        %v984 = vadd.f32 %v655, %v983
        %985 = vmatprep.mubr.f32.mxu0 0.0
        %986 = vmatmul.mubr.f32.gmra.mrb[0].mxu0 %v745
        %v987 = vpop.f32.mrb[0].mxu0
        %v988 = vadd.f32 %v651, %v987
        %v989 = vpop.f32.mrb[0].mxu0
        %v990 = vadd.f32 %v655, %v989
        %991 = vmatprep.mubr.f32.mxu0 0.0
        %992 = vmatmul.mubr.f32.gmra.mrb[0].mxu0 %v748
        %v993 = vpop.f32.mrb[0].mxu0
        %v994 = vadd.f32 %v651, %v993
        %v995 = vpop.f32.mrb[0].mxu0
        %v996 = vadd.f32 %v655, %v995
        %997 = vmatprep.mubr.f32.mxu0 0.0
        %998 = vmatmul.mubr.f32.gmra.mrb[0].mxu0 %v751
        %v999 = vpop.f32.mrb[0].mxu0
        %v1000 = vadd.f32 %v651, %v999
        %v1001 = vpop.f32.mrb[0].mxu0
        %v1002 = vadd.f32 %v655, %v1001
        %1003 = vmatprep.mubr.f32.mxu0 0.0
        %1004 = vmatmul.mubr.f32.gmra.mrb[0].mxu0 %v754
        %v1005 = vpop.f32.mrb[0].mxu0
        %v1006 = vadd.f32 %v651, %v1005
        %v1007 = vpop.f32.mrb[0].mxu0
        %v1008 = vadd.f32 %v655, %v1007
        %1009 = vmatprep.mubr.f32.mxu0 0.0
        %1010 = vmatmul.mubr.f32.gmra.mrb[0].mxu0 %v757
        %v1011 = vpop.f32.mrb[0].mxu0
        %v1012 = vadd.f32 %v651, %v1011
        %v1013 = vpop.f32.mrb[0].mxu0
        %v1014 = vadd.f32 %v655, %v1013
        %1015 = vdwg.mxu0
        %1016 = vmatprep.subr.mxu0 0.0
        %1017 = vmatpush1.msra.mxu0 %v624
        %1018 = vmatprep.subr.mxu0 0.0
        %1019 = vmatpush1.msra.mxu0 %v627
        %1020 = vmatprep.subr.mxu0 0.0
        %1021 = vmatpush1.msra.mxu0 %v630
        %1022 = vmatprep.subr.mxu0 0.0
        %1023 = vmatpush1.msra.mxu0 %v633
        %1024 = vmatprep.subr.mxu0 0.0
        %1025 = vmatpush1.msra.mxu0 %v636
        %1026 = vmatprep.subr.mxu0 0.0
        %1027 = vmatpush1.msra.mxu0 %v639
        %1028 = vmatprep.subr.mxu0 0.0
        %1029 = vmatpush1.msra.mxu0 %v642
        %1030 = vmatprep.subr.mxu0 0.0
        %1031 = vmatpush1.msra.mxu0 %v645
        %1032 = vmatprep.subr.mxu0 0.0
        %1033 = vmatpush1.msra.mxu0 0.0
        %1034 = vmatprep.subr.mxu0 0.0
        %1035 = vmatpush1.msra.mxu0 0.0
        %1036 = vmatprep.subr.mxu0 0.0
        %1037 = vmatpush1.msra.mxu0 0.0
        %1038 = vmatprep.subr.mxu0 0.0
        %1039 = vmatpush1.msra.mxu0 0.0
        %1040 = vmatprep.subr.mxu0 0.0
        %1041 = vmatpush1.msra.mxu0 0.0
        %1042 = vmatprep.subr.mxu0 0.0
        %1043 = vmatpush1.msra.mxu0 0.0
        %1044 = vmatprep.subr.mxu0 0.0
        %1045 = vmatpush1.msra.mxu0 0.0
        %1046 = vmatprep.subr.mxu0 0.0
        %1047 = vmatpush1.msra.mxu0 0.0
        %1048 = vmatprep.subr.mxu0 0.0
        %1049 = vmatpush1.msra.mxu0 0.0
        %1050 = vmatprep.subr.mxu0 0.0
        %1051 = vmatpush1.msra.mxu0 0.0
        %1052 = vmatprep.subr.mxu0 0.0
        %1053 = vmatpush1.msra.mxu0 0.0
        %1054 = vmatprep.subr.mxu0 0.0
        %1055 = vmatpush1.msra.mxu0 0.0
        %1056 = vmatprep.subr.mxu0 0.0
        %1057 = vmatpush1.msra.mxu0 0.0
        %1058 = vmatprep.subr.mxu0 0.0
        %1059 = vmatpush1.msra.mxu0 0.0
        %1060 = vmatprep.subr.mxu0 0.0
        %1061 = vmatpush1.msra.mxu0 0.0
        %1062 = vmatprep.subr.mxu0 0.0
        %1063 = vmatpush1.msra.mxu0 0.0
        %1064 = vmatprep.subr.mxu0 0.0
        %1065 = vmatpush1.msra.mxu0 0.0
        %1066 = vmatprep.subr.mxu0 0.0
        %1067 = vmatpush1.msra.mxu0 0.0
        %1068 = vmatprep.subr.mxu0 0.0
        %1069 = vmatpush1.msra.mxu0 0.0
        %1070 = vmatprep.subr.mxu0 0.0
        %1071 = vmatpush1.msra.mxu0 0.0
        %1072 = vmatprep.subr.mxu0 0.0
        %1073 = vmatpush1.msra.mxu0 0.0
        %1074 = vmatprep.subr.mxu0 0.0
        %1075 = vmatpush1.msra.mxu0 0.0
        %1076 = vmatprep.subr.mxu0 0.0
        %1077 = vmatpush1.msra.mxu0 0.0
        %1078 = vmatprep.subr.mxu0 0.0
        %1079 = vmatpush1.msra.mxu0 0.0
        %1080 = vmatprep.mubr.f32.mxu0 0.0
        %1081 = vmatmul.mubr.f32.gmra.mrb[0].mxu0 %v664
        %v1082 = vpop.f32.mrb[0].mxu0
        %v1083 = vadd.f32 %v659, %v1082
        %v1084 = vpop.f32.mrb[0].mxu0
        %1085 = vmatprep.mubr.f32.mxu0 0.0
        %1086 = vmatmul.mubr.f32.gmra.mrb[0].mxu0 %v667
        %v1087 = vpop.f32.mrb[0].mxu0
        %v1088 = vadd.f32 %v659, %v1087
        %v1089 = vpop.f32.mrb[0].mxu0
        %1090 = vmatprep.mubr.f32.mxu0 0.0
        %1091 = vmatmul.mubr.f32.gmra.mrb[0].mxu0 %v670
        %v1092 = vpop.f32.mrb[0].mxu0
        %v1093 = vadd.f32 %v659, %v1092
        %v1094 = vpop.f32.mrb[0].mxu0
        %1095 = vmatprep.mubr.f32.mxu0 0.0
        %1096 = vmatmul.mubr.f32.gmra.mrb[0].mxu0 %v673
        %v1097 = vpop.f32.mrb[0].mxu0
        %v1098 = vadd.f32 %v659, %v1097
        %v1099 = vpop.f32.mrb[0].mxu0
        %1100 = vmatprep.mubr.f32.mxu0 0.0
        %1101 = vmatmul.mubr.f32.gmra.mrb[0].mxu0 %v676
        %v1102 = vpop.f32.mrb[0].mxu0
        %v1103 = vadd.f32 %v659, %v1102
        %v1104 = vpop.f32.mrb[0].mxu0
        %1105 = vmatprep.mubr.f32.mxu0 0.0
        %1106 = vmatmul.mubr.f32.gmra.mrb[0].mxu0 %v679
        %v1107 = vpop.f32.mrb[0].mxu0
        %v1108 = vadd.f32 %v659, %v1107
        %v1109 = vpop.f32.mrb[0].mxu0
        %1110 = vmatprep.mubr.f32.mxu0 0.0
        %1111 = vmatmul.mubr.f32.gmra.mrb[0].mxu0 %v682
        %v1112 = vpop.f32.mrb[0].mxu0
        %v1113 = vadd.f32 %v659, %v1112
        %v1114 = vpop.f32.mrb[0].mxu0
        %1115 = vmatprep.mubr.f32.mxu0 0.0
        %1116 = vmatmul.mubr.f32.gmra.mrb[0].mxu0 %v685
        %v1117 = vpop.f32.mrb[0].mxu0
        %v1118 = vadd.f32 %v659, %v1117
        %v1119 = vpop.f32.mrb[0].mxu0
        %1120 = vmatprep.mubr.f32.mxu0 0.0
        %1121 = vmatmul.mubr.f32.gmra.mrb[0].mxu0 %v688
        %v1122 = vpop.f32.mrb[0].mxu0
        %v1123 = vadd.f32 %v659, %v1122
        %v1124 = vpop.f32.mrb[0].mxu0
        %1125 = vmatprep.mubr.f32.mxu0 0.0
        %1126 = vmatmul.mubr.f32.gmra.mrb[0].mxu0 %v691
        %v1127 = vpop.f32.mrb[0].mxu0
        %v1128 = vadd.f32 %v659, %v1127
        %v1129 = vpop.f32.mrb[0].mxu0
        %1130 = vmatprep.mubr.f32.mxu0 0.0
        %1131 = vmatmul.mubr.f32.gmra.mrb[0].mxu0 %v694
        %v1132 = vpop.f32.mrb[0].mxu0
        %v1133 = vadd.f32 %v659, %v1132
        %v1134 = vpop.f32.mrb[0].mxu0
        %1135 = vmatprep.mubr.f32.mxu0 0.0
        %1136 = vmatmul.mubr.f32.gmra.mrb[0].mxu0 %v697
        %v1137 = vpop.f32.mrb[0].mxu0
        %v1138 = vadd.f32 %v659, %v1137
        %v1139 = vpop.f32.mrb[0].mxu0
        %1140 = vmatprep.mubr.f32.mxu0 0.0
        %1141 = vmatmul.mubr.f32.gmra.mrb[0].mxu0 %v700
        %v1142 = vpop.f32.mrb[0].mxu0
        %v1143 = vadd.f32 %v659, %v1142
        %v1144 = vpop.f32.mrb[0].mxu0
        %1145 = vmatprep.mubr.f32.mxu0 0.0
        %1146 = vmatmul.mubr.f32.gmra.mrb[0].mxu0 %v703
        %v1147 = vpop.f32.mrb[0].mxu0
        %v1148 = vadd.f32 %v659, %v1147
        %v1149 = vpop.f32.mrb[0].mxu0
        %1150 = vmatprep.mubr.f32.mxu0 0.0
        %1151 = vmatmul.mubr.f32.gmra.mrb[0].mxu0 %v706
        %v1152 = vpop.f32.mrb[0].mxu0
        %v1153 = vadd.f32 %v659, %v1152
        %v1154 = vpop.f32.mrb[0].mxu0
        %1155 = vmatprep.mubr.f32.mxu0 0.0
        %1156 = vmatmul.mubr.f32.gmra.mrb[0].mxu0 %v709
        %v1157 = vpop.f32.mrb[0].mxu0
        %v1158 = vadd.f32 %v659, %v1157
        %v1159 = vpop.f32.mrb[0].mxu0
        %1160 = vmatprep.mubr.f32.mxu0 0.0
        %1161 = vmatmul.mubr.f32.gmra.mrb[0].mxu0 %v712
        %v1162 = vpop.f32.mrb[0].mxu0
        %v1163 = vadd.f32 %v659, %v1162
        %v1164 = vpop.f32.mrb[0].mxu0
        %1165 = vmatprep.mubr.f32.mxu0 0.0
        %1166 = vmatmul.mubr.f32.gmra.mrb[0].mxu0 %v715
        %v1167 = vpop.f32.mrb[0].mxu0
        %v1168 = vadd.f32 %v659, %v1167
        %v1169 = vpop.f32.mrb[0].mxu0
        %1170 = vmatprep.mubr.f32.mxu0 0.0
        %1171 = vmatmul.mubr.f32.gmra.mrb[0].mxu0 %v718
        %v1172 = vpop.f32.mrb[0].mxu0
        %v1173 = vadd.f32 %v659, %v1172
        %v1174 = vpop.f32.mrb[0].mxu0
        %1175 = vmatprep.mubr.f32.mxu0 0.0
        %1176 = vmatmul.mubr.f32.gmra.mrb[0].mxu0 %v721
        %v1177 = vpop.f32.mrb[0].mxu0
        %v1178 = vadd.f32 %v659, %v1177
        %v1179 = vpop.f32.mrb[0].mxu0
        %1180 = vmatprep.mubr.f32.mxu0 0.0
        %1181 = vmatmul.mubr.f32.gmra.mrb[0].mxu0 %v724
        %v1182 = vpop.f32.mrb[0].mxu0
        %v1183 = vadd.f32 %v659, %v1182
        %v1184 = vpop.f32.mrb[0].mxu0
        %1185 = vmatprep.mubr.f32.mxu0 0.0
        %1186 = vmatmul.mubr.f32.gmra.mrb[0].mxu0 %v727
        %v1187 = vpop.f32.mrb[0].mxu0
        %v1188 = vadd.f32 %v659, %v1187
        %v1189 = vpop.f32.mrb[0].mxu0
        %1190 = vmatprep.mubr.f32.mxu0 0.0
        %1191 = vmatmul.mubr.f32.gmra.mrb[0].mxu0 %v730
        %v1192 = vpop.f32.mrb[0].mxu0
        %v1193 = vadd.f32 %v659, %v1192
        %v1194 = vpop.f32.mrb[0].mxu0
        %1195 = vmatprep.mubr.f32.mxu0 0.0
        %1196 = vmatmul.mubr.f32.gmra.mrb[0].mxu0 %v733
        %v1197 = vpop.f32.mrb[0].mxu0
        %v1198 = vadd.f32 %v659, %v1197
        %v1199 = vpop.f32.mrb[0].mxu0
        %1200 = vmatprep.mubr.f32.mxu0 0.0
        %1201 = vmatmul.mubr.f32.gmra.mrb[0].mxu0 %v736
        %v1202 = vpop.f32.mrb[0].mxu0
        %v1203 = vadd.f32 %v659, %v1202
        %v1204 = vpop.f32.mrb[0].mxu0
        %1205 = vmatprep.mubr.f32.mxu0 0.0
        %1206 = vmatmul.mubr.f32.gmra.mrb[0].mxu0 %v739
        %v1207 = vpop.f32.mrb[0].mxu0
        %v1208 = vadd.f32 %v659, %v1207
        %v1209 = vpop.f32.mrb[0].mxu0
        %1210 = vmatprep.mubr.f32.mxu0 0.0
        %1211 = vmatmul.mubr.f32.gmra.mrb[0].mxu0 %v742
        %v1212 = vpop.f32.mrb[0].mxu0
        %v1213 = vadd.f32 %v659, %v1212
        %v1214 = vpop.f32.mrb[0].mxu0
        %1215 = vmatprep.mubr.f32.mxu0 0.0
        %1216 = vmatmul.mubr.f32.gmra.mrb[0].mxu0 %v745
        %v1217 = vpop.f32.mrb[0].mxu0
        %v1218 = vadd.f32 %v659, %v1217
        %v1219 = vpop.f32.mrb[0].mxu0
        %1220 = vmatprep.mubr.f32.mxu0 0.0
        %1221 = vmatmul.mubr.f32.gmra.mrb[0].mxu0 %v748
        %v1222 = vpop.f32.mrb[0].mxu0
        %v1223 = vadd.f32 %v659, %v1222
        %v1224 = vpop.f32.mrb[0].mxu0
        %1225 = vmatprep.mubr.f32.mxu0 0.0
        %1226 = vmatmul.mubr.f32.gmra.mrb[0].mxu0 %v751
        %v1227 = vpop.f32.mrb[0].mxu0
        %v1228 = vadd.f32 %v659, %v1227
        %v1229 = vpop.f32.mrb[0].mxu0
        %1230 = vmatprep.mubr.f32.mxu0 0.0
        %1231 = vmatmul.mubr.f32.gmra.mrb[0].mxu0 %v754
        %v1232 = vpop.f32.mrb[0].mxu0
        %v1233 = vadd.f32 %v659, %v1232
        %v1234 = vpop.f32.mrb[0].mxu0
        %1235 = vmatprep.mubr.f32.mxu0 0.0
        %1236 = vmatmul.mubr.f32.gmra.mrb[0].mxu0 %v757
        %v1237 = vpop.f32.mrb[0].mxu0
        %v1238 = vadd.f32 %v659, %v1237
        %v1239 = vpop.f32.mrb[0].mxu0
        %1240 = vdwg.mxu0
        %1241 = vst [vmem:[%s164] sm:$0xff] %v826
        %1242 = vst [vmem:[%s164 + $0x8] sm:$0xff] %v828
        %1243 = vst [vmem:[%s164 + $0x10] sm:$0xff] %v1083
        %1244 = vst [vmem:[%s164 + $0x18] sm:$0xff] %v832
        %1245 = vst [vmem:[%s164 + $0x20] sm:$0xff] %v834
        %1246 = vst [vmem:[%s164 + $0x28] sm:$0xff] %v1088
        %1247 = vst [vmem:[%s164 + $0x30] sm:$0xff] %v838
        %1248 = vst [vmem:[%s164 + $0x38] sm:$0xff] %v840
        %1249 = vst [vmem:[%s164 + $0x40] sm:$0xff] %v1093
        %1250 = vst [vmem:[%s164 + $0x48] sm:$0xff] %v844
        %1251 = vst [vmem:[%s164 + $0x50] sm:$0xff] %v846
        %1252 = vst [vmem:[%s164 + $0x58] sm:$0xff] %v1098
        %1253 = vst [vmem:[%s164 + $0x60] sm:$0xff] %v850
        %1254 = vst [vmem:[%s164 + $0x68] sm:$0xff] %v852
        %1255 = vst [vmem:[%s164 + $0x70] sm:$0xff] %v1103
        %1256 = vst [vmem:[%s164 + $0x78] sm:$0xff] %v856
        %1257 = vst [vmem:[%s164 + $0x80] sm:$0xff] %v858
        %1258 = vst [vmem:[%s164 + $0x88] sm:$0xff] %v1108
        %1259 = vst [vmem:[%s164 + $0x90] sm:$0xff] %v862
        %1260 = vst [vmem:[%s164 + $0x98] sm:$0xff] %v864
        %1261 = vst [vmem:[%s164 + $0xa0] sm:$0xff] %v1113
        %1262 = vst [vmem:[%s164 + $0xa8] sm:$0xff] %v868
        %1263 = vst [vmem:[%s164 + $0xb0] sm:$0xff] %v870
        %1264 = vst [vmem:[%s164 + $0xb8] sm:$0xff] %v1118
        %1265 = vst [vmem:[%s164 + $0xc0] sm:$0xff] %v874
        %1266 = vst [vmem:[%s164 + $0xc8] sm:$0xff] %v876
        %1267 = vst [vmem:[%s164 + $0xd0] sm:$0xff] %v1123
        %1268 = vst [vmem:[%s164 + $0xd8] sm:$0xff] %v880
        %1269 = vst [vmem:[%s164 + $0xe0] sm:$0xff] %v882
        %1270 = vst [vmem:[%s164 + $0xe8] sm:$0xff] %v1128
        %1271 = vst [vmem:[%s164 + $0xf0] sm:$0xff] %v886
        %1272 = vst [vmem:[%s164 + $0xf8] sm:$0xff] %v888
        %1273 = vst [vmem:[%s164 + $0x100] sm:$0xff] %v1133
        %1274 = vst [vmem:[%s164 + $0x108] sm:$0xff] %v892
        %1275 = vst [vmem:[%s164 + $0x110] sm:$0xff] %v894
        %1276 = vst [vmem:[%s164 + $0x118] sm:$0xff] %v1138
        %1277 = vst [vmem:[%s164 + $0x120] sm:$0xff] %v898
        %1278 = vst [vmem:[%s164 + $0x128] sm:$0xff] %v900
        %1279 = vst [vmem:[%s164 + $0x130] sm:$0xff] %v1143
        %1280 = vst [vmem:[%s164 + $0x138] sm:$0xff] %v904
        %1281 = vst [vmem:[%s164 + $0x140] sm:$0xff] %v906
        %1282 = vst [vmem:[%s164 + $0x148] sm:$0xff] %v1148
        %1283 = vst [vmem:[%s164 + $0x150] sm:$0xff] %v910
        %1284 = vst [vmem:[%s164 + $0x158] sm:$0xff] %v912
        %1285 = vst [vmem:[%s164 + $0x160] sm:$0xff] %v1153
        %1286 = vst [vmem:[%s164 + $0x168] sm:$0xff] %v916
        %1287 = vst [vmem:[%s164 + $0x170] sm:$0xff] %v918
        %1288 = vst [vmem:[%s164 + $0x178] sm:$0xff] %v1158
        %1289 = vst [vmem:[%s164 + $0x180] sm:$0xff] %v922
        %1290 = vst [vmem:[%s164 + $0x188] sm:$0xff] %v924
        %1291 = vst [vmem:[%s164 + $0x190] sm:$0xff] %v1163
        %1292 = vst [vmem:[%s164 + $0x198] sm:$0xff] %v928
        %1293 = vst [vmem:[%s164 + $0x1a0] sm:$0xff] %v930
        %1294 = vst [vmem:[%s164 + $0x1a8] sm:$0xff] %v1168
        %1295 = vst [vmem:[%s164 + $0x1b0] sm:$0xff] %v934
        %1296 = vst [vmem:[%s164 + $0x1b8] sm:$0xff] %v936
        %1297 = vst [vmem:[%s164 + $0x1c0] sm:$0xff] %v1173
        %1298 = vst [vmem:[%s164 + $0x1c8] sm:$0xff] %v940
        %1299 = vst [vmem:[%s164 + $0x1d0] sm:$0xff] %v942
        %1300 = vst [vmem:[%s164 + $0x1d8] sm:$0xff] %v1178
        %1301 = vst [vmem:[%s164 + $0x1e0] sm:$0xff] %v946
        %1302 = vst [vmem:[%s164 + $0x1e8] sm:$0xff] %v948
        %1303 = vst [vmem:[%s164 + $0x1f0] sm:$0xff] %v1183
        %1304 = vst [vmem:[%s164 + $0x1f8] sm:$0xff] %v952
        %1305 = vst [vmem:[%s164 + $0x200] sm:$0xff] %v954
        %1306 = vst [vmem:[%s164 + $0x208] sm:$0xff] %v1188
        %1307 = vst [vmem:[%s164 + $0x210] sm:$0xff] %v958
        %1308 = vst [vmem:[%s164 + $0x218] sm:$0xff] %v960
        %1309 = vst [vmem:[%s164 + $0x220] sm:$0xff] %v1193
        %1310 = vst [vmem:[%s164 + $0x228] sm:$0xff] %v964
        %1311 = vst [vmem:[%s164 + $0x230] sm:$0xff] %v966
        %1312 = vst [vmem:[%s164 + $0x238] sm:$0xff] %v1198
        %1313 = vst [vmem:[%s164 + $0x240] sm:$0xff] %v970
        %1314 = vst [vmem:[%s164 + $0x248] sm:$0xff] %v972
        %1315 = vst [vmem:[%s164 + $0x250] sm:$0xff] %v1203
        %1316 = vst [vmem:[%s164 + $0x258] sm:$0xff] %v976
        %1317 = vst [vmem:[%s164 + $0x260] sm:$0xff] %v978
        %1318 = vst [vmem:[%s164 + $0x268] sm:$0xff] %v1208
        %1319 = vst [vmem:[%s164 + $0x270] sm:$0xff] %v982
        %1320 = vst [vmem:[%s164 + $0x278] sm:$0xff] %v984
        %1321 = vst [vmem:[%s164 + $0x280] sm:$0xff] %v1213
        %1322 = vst [vmem:[%s164 + $0x288] sm:$0xff] %v988
        %1323 = vst [vmem:[%s164 + $0x290] sm:$0xff] %v990
        %1324 = vst [vmem:[%s164 + $0x298] sm:$0xff] %v1218
        %1325 = vst [vmem:[%s164 + $0x2a0] sm:$0xff] %v994
        %1326 = vst [vmem:[%s164 + $0x2a8] sm:$0xff] %v996
        %1327 = vst [vmem:[%s164 + $0x2b0] sm:$0xff] %v1223
        %1328 = vst [vmem:[%s164 + $0x2b8] sm:$0xff] %v1000
        %1329 = vst [vmem:[%s164 + $0x2c0] sm:$0xff] %v1002
        %1330 = vst [vmem:[%s164 + $0x2c8] sm:$0xff] %v1228
        %1331 = vst [vmem:[%s164 + $0x2d0] sm:$0xff] %v1006
        %1332 = vst [vmem:[%s164 + $0x2d8] sm:$0xff] %v1008
        %1333 = vst [vmem:[%s164 + $0x2e0] sm:$0xff] %v1233
        %1334 = vst [vmem:[%s164 + $0x2e8] sm:$0xff] %v1012
        %1335 = vst [vmem:[%s164 + $0x2f0] sm:$0xff] %v1014
        %1336 = vst [vmem:[%s164 + $0x2f8] sm:$0xff] %v1238
        %s1337 = sand.u32 %s93, 1
        %s1338 = scalar_lea.sflag [#allocation3], %s1337
        %s1339 = sand.u32 %s93, 1
        %s1340 = smul.addr %s1339, 768
        %s1341 = scalar_lea.vmem [#allocation2], %s1340
        // Predicated region
        $region33: #{tpu_custom_call.1} parent=31 // pred_check
          %p1342 = pneg %p103
        $region34: #{tpu_custom_call.1} parent=31 // pred_check_branch
          %1344 = sbr.rel (%p1342) target = $region36
        $region35: #{tpu_custom_call.1} parent=31 // pred_region
          %s1345 = smul.u32 32, %s17
          %s1347 = ssub.s32 12288, 12288
          %1348 = vsyncadd %s1338, %s1347
          %s1349 = smul.addr %s1345, 3
          %s1350 = smul.addr %s1349, 128
          %s1351 = scalar_lea.hbm %s3, %s1350
          %s1352 = sshll.u32 %s1341, 4
          %s1353 = int_to_ptr.vmem [resolvable:$true] %s1352
          %1358 = dma.vmem_to_hbm [thread:$0]  %s1353, 12288, %s1351, %s1338, 384, 384, 24
        $region36: #{tpu_custom_call.1} parent=31 // pred_fallthru
          _
      $region32: #{tpu_custom_call.1} parent=5 // pred_fallthru
        _
      %p1359 = scmp.le.s32.totalorder 2, %s12
      // Predicated region
      $region37: #{tpu_custom_call.1} parent=5 // pred_check
        %p1360 = pneg %p1359
      $region38: #{tpu_custom_call.1} parent=5 // pred_check_branch
        %1362 = sbr.rel (%p1360) target = $region40
      $region39: #{tpu_custom_call.1} parent=5 // pred_region
        %s1363 = ssub.s32 %s12, 2
        // Predicated region
        $region41: #{tpu_custom_call.1} parent=39 // pred_check
          %p1364 = pneg %p109
        $region42: #{tpu_custom_call.1} parent=39 // pred_check_branch
          %1366 = sbr.rel (%p1364) target = $region44
        $region43: #{tpu_custom_call.1} parent=39 // pred_region
          %s1367 = sand.u32 %s94, 1
          %s1368 = scalar_lea.sflag [#allocation3], %s1367
          %s1369 = sand.u32 %s94, 1
          %s1370 = smul.addr %s1369, 768
          %s1371 = scalar_lea.vmem [#allocation2], %s1370
          %1372 = dma.done %s1368, 12288
        $region44: #{tpu_custom_call.1} parent=39 // pred_fallthru
          _
      $region40: #{tpu_custom_call.1} parent=5 // pred_fallthru
        _
    $region6: #{tpu_custom_call.1} parent=1 // loop_footer
      %s16 = sadd.s32 1, %s12
    $region7: #{tpu_custom_call.1} parent=1 // loop_footer_branch
      %11 = sbr.rel target = $region3
    $region8: #{tpu_custom_call.1} parent=1 // loop_exit
      _
    %1373 = vsyncpa [#allocation3], 1
    %s1374 = scalar_lea.sflag [#allocation3], 1
    %1375 = vsyncpa %s1374, 1

</llo_original>
